<compile_context>
chip_gen: v7x
topology: tpu7x:2x2x1
jax: 0.10.0
libtpu: 0.0.40
codegen_flags: <defaults>
</compile_context>

<pallas_src>
import math

import jax
import jax.numpy as jnp
import numpy as np
from jax.experimental import pallas as pl

INPUT_SIZE = 7
HIDDEN_SIZE = 32
NUM_LAYERS = 2
OUTPUT_SIZE = 7


def _lstm_predictor_kernel(
    x_ref,      # (T*B, I)  time-major flattened input: row t*B + b == x[b, t, :]
    wih0_ref,   # (I, 4H)   layer-0 input weights, transposed
    whh0_ref,   # (H, 4H)   layer-0 recurrent weights, transposed
    b0_ref,     # (1, 4H)   layer-0 bias (b_ih + b_hh)
    w1_ref,     # (2H, 4H)  layer-1 fused weights [W_ih.T ; W_hh.T]
    b1_ref,     # (1, 4H)   layer-1 bias (b_ih + b_hh)
    wfc_ref,    # (H, O)    fc weight, transposed
    bfc_ref,    # (1, O)    fc bias
    out_ref,    # (B, O)    output
):
    B = out_ref.shape[0]
    T = x_ref.shape[0] // B
    H = whh0_ref.shape[0]

    # Read weights / biases once per invocation (no per-step reloads/broadcasts).
    whh0 = whh0_ref[...]
    w1 = w1_ref[...]
    b1 = b1_ref[...]

    # Layer-0 input projection hoisted out of the recurrence: a single tall
    # (T*B, I) @ (I, 4H) matmul, bias folded in.
    xp = (
        jnp.dot(x_ref[...].astype(jnp.float32), wih0_ref[...],
                preferred_element_type=jnp.float32)
        + b0_ref[...]
    )  # (T*B, 4H)

    def lstm_gates(gates, c_prev):
        # Gates laid out as [i | f | g | o] (PyTorch order).  One full-width
        # sigmoid and one full-width tanh; the i/f/g/o groups are static slices.
        sig = jax.nn.sigmoid(gates)
        tnh = jnp.tanh(gates)
        i_g = sig[:, 0 * H:1 * H]
        f_g = sig[:, 1 * H:2 * H]
        g_g = tnh[:, 2 * H:3 * H]
        o_g = sig[:, 3 * H:4 * H]
        c_new = f_g * c_prev + i_g * g_g
        h_new = o_g * jnp.tanh(c_new)
        return h_new, c_new

    h1 = jnp.zeros((B, H), jnp.float32)
    c1 = jnp.zeros((B, H), jnp.float32)
    h2 = jnp.zeros((B, H), jnp.float32)
    c2 = jnp.zeros((B, H), jnp.float32)

    # T is small and static: fully unrolled time loop, state stays in vregs.
    for t in range(T):
        # Layer 0: input projection precomputed, only the recurrent matmul here.
        g0 = xp[t * B:(t + 1) * B, :] + jnp.dot(
            h1, whh0, preferred_element_type=jnp.float32)
        h1, c1 = lstm_gates(g0, c1)

        # Layer 1: single fused matmul [h1 | h2] @ [W_ih.T ; W_hh.T].
        g1 = jnp.dot(jnp.concatenate([h1, h2], axis=-1), w1,
                     preferred_element_type=jnp.float32) + b1
        h2, c2 = lstm_gates(g1, c2)

    # fc(out[:, -1, :]) — computed and stored exactly once.
    out_ref[...] = (
        jnp.dot(h2, wfc_ref[...], preferred_element_type=jnp.float32)
        + bfc_ref[...]
    ).astype(out_ref.dtype)


def lstm_predictor_pallas(x, params):
    """x: (B, T, I) float32 (batch_first, like PyTorch). Returns (B, O) float32."""
    B, T, I = x.shape
    H = HIDDEN_SIZE
    O = OUTPUT_SIZE

    # Weight prep (layout plumbing only): transpose so in-kernel matmuls are
    # (M, K) @ (K, 4H); fold the two biases; stack layer-1 weights for fusion.
    wih0_t = params["weight_ih_l0"].T                              # (I, 4H)
    whh0_t = params["weight_hh_l0"].T                              # (H, 4H)
    b0 = (params["bias_ih_l0"] + params["bias_hh_l0"]).reshape(1, 4 * H)
    w1 = jnp.concatenate(
        [params["weight_ih_l1"].T, params["weight_hh_l1"].T], axis=0)  # (2H, 4H)
    b1 = (params["bias_ih_l1"] + params["bias_hh_l1"]).reshape(1, 4 * H)
    wfc_t = params["fc_weight"].T                                  # (H, O)
    bfc = params["fc_bias"].reshape(1, O)

    # Time-major flattened input so per-step rows are contiguous and the hoisted
    # layer-0 projection is one tall matmul: row t*B + b == x[b, t, :].
    x_tb = jnp.transpose(x, (1, 0, 2)).reshape(T * B, I)

    # No grid: whole working set (~70 KiB) fits comfortably in VMEM on all
    # generations; everything is copied in once and the kernel runs once.
    return pl.pallas_call(
        _lstm_predictor_kernel,
        out_shape=jax.ShapeDtypeStruct((B, O), jnp.float32),
    )(x_tb, wih0_t, whh0_t, b0, w1, b1, wfc_t, bfc)


def init_params(key, input_size=INPUT_SIZE, hidden_size=HIDDEN_SIZE,
                num_layers=NUM_LAYERS, output_size=OUTPUT_SIZE):
    """Deterministic init mirroring PyTorch's uniform(-1/sqrt(H), 1/sqrt(H))."""
    std = 1.0 / math.sqrt(hidden_size)
    keys = jax.random.split(key, 4 * num_layers + 2)
    params = {}
    k = 0
    for layer in range(num_layers):
        in_sz = input_size if layer == 0 else hidden_size
        params[f"weight_ih_l{layer}"] = jax.random.uniform(
            keys[k], (4 * hidden_size, in_sz), jnp.float32, -std, std); k += 1
        params[f"weight_hh_l{layer}"] = jax.random.uniform(
            keys[k], (4 * hidden_size, hidden_size), jnp.float32, -std, std); k += 1
        params[f"bias_ih_l{layer}"] = jax.random.uniform(
            keys[k], (4 * hidden_size,), jnp.float32, -std, std); k += 1
        params[f"bias_hh_l{layer}"] = jax.random.uniform(
            keys[k], (4 * hidden_size,), jnp.float32, -std, std); k += 1
    params["fc_weight"] = jax.random.uniform(
        keys[k], (output_size, hidden_size), jnp.float32, -std, std); k += 1
    params["fc_bias"] = jax.random.uniform(
        keys[k], (output_size,), jnp.float32, -std, std); k += 1
    return params


def lstm_predictor_ref(x, params):
    """Pure-JAX reference matching torch.nn.LSTM(batch_first=True) + Linear."""
    B, T, I = x.shape
    H = HIDDEN_SIZE

    def cell(x_t, h, c, wih, whh, bih, bhh):
        gates = x_t @ wih.T + bih + h @ whh.T + bhh
        i = jax.nn.sigmoid(gates[:, 0 * H:1 * H])
        f = jax.nn.sigmoid(gates[:, 1 * H:2 * H])
        g = jnp.tanh(gates[:, 2 * H:3 * H])
        o = jax.nn.sigmoid(gates[:, 3 * H:4 * H])
        c = f * c + i * g
        h = o * jnp.tanh(c)
        return h, c

    h1 = c1 = h2 = c2 = jnp.zeros((B, H), jnp.float32)
    for t in range(T):
        h1, c1 = cell(x[:, t, :], h1, c1,
                      params["weight_ih_l0"], params["weight_hh_l0"],
                      params["bias_ih_l0"], params["bias_hh_l0"])
        h2, c2 = cell(h1, h2, c2,
                      params["weight_ih_l1"], params["weight_hh_l1"],
                      params["bias_ih_l1"], params["bias_hh_l1"])
    return h2 @ params["fc_weight"].T + params["fc_bias"]


if __name__ == "__main__":
    key = jax.random.PRNGKey(0)
    k_param, k_x = jax.random.split(key)

    B, T = 2, 8
    x = jax.random.normal(k_x, (B, T, INPUT_SIZE), dtype=jnp.float32)
    params = init_params(k_param)

    out = lstm_predictor_pallas(x, params)
    out = jax.block_until_ready(out)

    ref = lstm_predictor_ref(x, params)
    np.testing.assert_allclose(np.asarray(out), np.asarray(ref), rtol=1e-5, atol=1e-5)

    print("KERNEL_OK")
</pallas_src>

<mosaic_0001>
module attributes {stable_mosaic.version = 11 : i64} {
  func.func @_lstm_predictor_kernel(%arg0: memref<16x7xf32, #tpu.memory_space<vmem>>, %arg1: memref<7x128xf32, #tpu.memory_space<vmem>>, %arg2: memref<32x128xf32, #tpu.memory_space<vmem>>, %arg3: memref<1x128xf32, #tpu.memory_space<vmem>>, %arg4: memref<64x128xf32, #tpu.memory_space<vmem>>, %arg5: memref<1x128xf32, #tpu.memory_space<vmem>>, %arg6: memref<32x7xf32, #tpu.memory_space<vmem>>, %arg7: memref<1x7xf32, #tpu.memory_space<vmem>>, %arg8: memref<2x7xf32, #tpu.memory_space<vmem>>) attributes {dimension_semantics = [], scalar_prefetch = 0 : i64, scratch_operands = 0 : i64, tpu.core_type = #tpu.core_type<tc>} {
    %c0 = arith.constant 0 : index
    %c0_0 = arith.constant 0 : index
    %0 = vector.load %arg2[%c0, %c0_0] : memref<32x128xf32, #tpu.memory_space<vmem>>, vector<32x128xf32>
    %c0_1 = arith.constant 0 : index
    %c0_2 = arith.constant 0 : index
    %1 = vector.load %arg4[%c0_1, %c0_2] : memref<64x128xf32, #tpu.memory_space<vmem>>, vector<64x128xf32>
    %c0_3 = arith.constant 0 : index
    %c0_4 = arith.constant 0 : index
    %2 = vector.load %arg5[%c0_3, %c0_4] : memref<1x128xf32, #tpu.memory_space<vmem>>, vector<1x128xf32>
    %c0_5 = arith.constant 0 : index
    %c0_6 = arith.constant 0 : index
    %3 = vector.load %arg0[%c0_5, %c0_6] : memref<16x7xf32, #tpu.memory_space<vmem>>, vector<16x7xf32>
    %c0_7 = arith.constant 0 : index
    %c0_8 = arith.constant 0 : index
    %4 = vector.load %arg1[%c0_7, %c0_8] : memref<7x128xf32, #tpu.memory_space<vmem>>, vector<7x128xf32>
    %cst = arith.constant dense<0.000000e+00> : vector<16x128xf32>
    %5 = tpu.matmul %3, %4, %cst {dimension_numbers = #tpu.dot_dimension_numbers<[1], [0], [0], [1], [0, 0, 1, 1], [], []>} : vector<16x7xf32>, vector<7x128xf32>, vector<16x128xf32> -> vector<16x128xf32>
    %c0_9 = arith.constant 0 : index
    %c0_10 = arith.constant 0 : index
    %6 = vector.load %arg3[%c0_9, %c0_10] : memref<1x128xf32, #tpu.memory_space<vmem>>, vector<1x128xf32>
    %7 = vector.broadcast %6 : vector<1x128xf32> to vector<16x128xf32>
    %8 = arith.addf %5, %7 : vector<16x128xf32>
    %cst_11 = arith.constant 0.000000e+00 : f32
    %9 = vector.broadcast %cst_11 : f32 to vector<2x32xf32>
    %cst_12 = arith.constant 0.000000e+00 : f32
    %10 = vector.broadcast %cst_12 : f32 to vector<2x32xf32>
    %cst_13 = arith.constant 0.000000e+00 : f32
    %11 = vector.broadcast %cst_13 : f32 to vector<2x32xf32>
    %cst_14 = arith.constant 0.000000e+00 : f32
    %12 = vector.broadcast %cst_14 : f32 to vector<2x32xf32>
    %13 = vector.extract_strided_slice %8 {offsets = [0, 0], sizes = [2, 128], strides = [1, 1]} : vector<16x128xf32> to vector<2x128xf32>
    %cst_15 = arith.constant dense<0.000000e+00> : vector<2x128xf32>
    %14 = tpu.matmul %9, %0, %cst_15 {dimension_numbers = #tpu.dot_dimension_numbers<[1], [0], [0], [1], [0, 0, 1, 1], [], []>} : vector<2x32xf32>, vector<32x128xf32>, vector<2x128xf32> -> vector<2x128xf32>
    %15 = arith.addf %13, %14 : vector<2x128xf32>
    %16 = arith.negf %15 : vector<2x128xf32>
    %17 = math.exp %16 : vector<2x128xf32>
    %cst_16 = arith.constant 1.000000e+00 : f32
    %18 = vector.broadcast %cst_16 : f32 to vector<2x128xf32>
    %19 = arith.addf %18, %17 : vector<2x128xf32>
    %20 = arith.divf %18, %19 : vector<2x128xf32>
    %21 = math.tanh %15 : vector<2x128xf32>
    %22 = vector.extract_strided_slice %20 {offsets = [0, 0], sizes = [2, 32], strides = [1, 1]} : vector<2x128xf32> to vector<2x32xf32>
    %23 = vector.extract_strided_slice %20 {offsets = [0, 32], sizes = [2, 32], strides = [1, 1]} : vector<2x128xf32> to vector<2x32xf32>
    %24 = vector.extract_strided_slice %21 {offsets = [0, 64], sizes = [2, 32], strides = [1, 1]} : vector<2x128xf32> to vector<2x32xf32>
    %25 = vector.extract_strided_slice %20 {offsets = [0, 96], sizes = [2, 32], strides = [1, 1]} : vector<2x128xf32> to vector<2x32xf32>
    %26 = arith.mulf %23, %10 : vector<2x32xf32>
    %27 = arith.mulf %22, %24 : vector<2x32xf32>
    %28 = arith.addf %26, %27 : vector<2x32xf32>
    %29 = math.tanh %28 : vector<2x32xf32>
    %30 = arith.mulf %25, %29 : vector<2x32xf32>
    %31 = tpu.concatenate %30, %11 in 1 : vector<2x32xf32>, vector<2x32xf32> -> vector<2x64xf32>
    %cst_17 = arith.constant dense<0.000000e+00> : vector<2x128xf32>
    %32 = tpu.matmul %31, %1, %cst_17 {dimension_numbers = #tpu.dot_dimension_numbers<[1], [0], [0], [1], [0, 0, 1, 1], [], []>} : vector<2x64xf32>, vector<64x128xf32>, vector<2x128xf32> -> vector<2x128xf32>
    %33 = vector.broadcast %2 : vector<1x128xf32> to vector<2x128xf32>
    %34 = arith.addf %32, %33 : vector<2x128xf32>
    %35 = arith.negf %34 : vector<2x128xf32>
    %36 = math.exp %35 : vector<2x128xf32>
    %cst_18 = arith.constant 1.000000e+00 : f32
    %37 = vector.broadcast %cst_18 : f32 to vector<2x128xf32>
    %38 = arith.addf %37, %36 : vector<2x128xf32>
    %39 = arith.divf %37, %38 : vector<2x128xf32>
    %40 = math.tanh %34 : vector<2x128xf32>
    %41 = vector.extract_strided_slice %39 {offsets = [0, 0], sizes = [2, 32], strides = [1, 1]} : vector<2x128xf32> to vector<2x32xf32>
    %42 = vector.extract_strided_slice %39 {offsets = [0, 32], sizes = [2, 32], strides = [1, 1]} : vector<2x128xf32> to vector<2x32xf32>
    %43 = vector.extract_strided_slice %40 {offsets = [0, 64], sizes = [2, 32], strides = [1, 1]} : vector<2x128xf32> to vector<2x32xf32>
    %44 = vector.extract_strided_slice %39 {offsets = [0, 96], sizes = [2, 32], strides = [1, 1]} : vector<2x128xf32> to vector<2x32xf32>
    %45 = arith.mulf %42, %12 : vector<2x32xf32>
    %46 = arith.mulf %41, %43 : vector<2x32xf32>
    %47 = arith.addf %45, %46 : vector<2x32xf32>
    %48 = math.tanh %47 : vector<2x32xf32>
    %49 = arith.mulf %44, %48 : vector<2x32xf32>
    %50 = vector.extract_strided_slice %8 {offsets = [2, 0], sizes = [2, 128], strides = [1, 1]} : vector<16x128xf32> to vector<2x128xf32>
    %cst_19 = arith.constant dense<0.000000e+00> : vector<2x128xf32>
    %51 = tpu.matmul %30, %0, %cst_19 {dimension_numbers = #tpu.dot_dimension_numbers<[1], [0], [0], [1], [0, 0, 1, 1], [], []>} : vector<2x32xf32>, vector<32x128xf32>, vector<2x128xf32> -> vector<2x128xf32>
    %52 = arith.addf %50, %51 : vector<2x128xf32>
    %53 = arith.negf %52 : vector<2x128xf32>
    %54 = math.exp %53 : vector<2x128xf32>
    %cst_20 = arith.constant 1.000000e+00 : f32
    %55 = vector.broadcast %cst_20 : f32 to vector<2x128xf32>
    %56 = arith.addf %55, %54 : vector<2x128xf32>
    %57 = arith.divf %55, %56 : vector<2x128xf32>
    %58 = math.tanh %52 : vector<2x128xf32>
    %59 = vector.extract_strided_slice %57 {offsets = [0, 0], sizes = [2, 32], strides = [1, 1]} : vector<2x128xf32> to vector<2x32xf32>
    %60 = vector.extract_strided_slice %57 {offsets = [0, 32], sizes = [2, 32], strides = [1, 1]} : vector<2x128xf32> to vector<2x32xf32>
    %61 = vector.extract_strided_slice %58 {offsets = [0, 64], sizes = [2, 32], strides = [1, 1]} : vector<2x128xf32> to vector<2x32xf32>
    %62 = vector.extract_strided_slice %57 {offsets = [0, 96], sizes = [2, 32], strides = [1, 1]} : vector<2x128xf32> to vector<2x32xf32>
    %63 = arith.mulf %60, %28 : vector<2x32xf32>
    %64 = arith.mulf %59, %61 : vector<2x32xf32>
    %65 = arith.addf %63, %64 : vector<2x32xf32>
    %66 = math.tanh %65 : vector<2x32xf32>
    %67 = arith.mulf %62, %66 : vector<2x32xf32>
    %68 = tpu.concatenate %67, %49 in 1 : vector<2x32xf32>, vector<2x32xf32> -> vector<2x64xf32>
    %cst_21 = arith.constant dense<0.000000e+00> : vector<2x128xf32>
    %69 = tpu.matmul %68, %1, %cst_21 {dimension_numbers = #tpu.dot_dimension_numbers<[1], [0], [0], [1], [0, 0, 1, 1], [], []>} : vector<2x64xf32>, vector<64x128xf32>, vector<2x128xf32> -> vector<2x128xf32>
    %70 = vector.broadcast %2 : vector<1x128xf32> to vector<2x128xf32>
    %71 = arith.addf %69, %70 : vector<2x128xf32>
    %72 = arith.negf %71 : vector<2x128xf32>
    %73 = math.exp %72 : vector<2x128xf32>
    %cst_22 = arith.constant 1.000000e+00 : f32
    %74 = vector.broadcast %cst_22 : f32 to vector<2x128xf32>
    %75 = arith.addf %74, %73 : vector<2x128xf32>
    %76 = arith.divf %74, %75 : vector<2x128xf32>
    %77 = math.tanh %71 : vector<2x128xf32>
    %78 = vector.extract_strided_slice %76 {offsets = [0, 0], sizes = [2, 32], strides = [1, 1]} : vector<2x128xf32> to vector<2x32xf32>
    %79 = vector.extract_strided_slice %76 {offsets = [0, 32], sizes = [2, 32], strides = [1, 1]} : vector<2x128xf32> to vector<2x32xf32>
    %80 = vector.extract_strided_slice %77 {offsets = [0, 64], sizes = [2, 32], strides = [1, 1]} : vector<2x128xf32> to vector<2x32xf32>
    %81 = vector.extract_strided_slice %76 {offsets = [0, 96], sizes = [2, 32], strides = [1, 1]} : vector<2x128xf32> to vector<2x32xf32>
    %82 = arith.mulf %79, %47 : vector<2x32xf32>
    %83 = arith.mulf %78, %80 : vector<2x32xf32>
    %84 = arith.addf %82, %83 : vector<2x32xf32>
    %85 = math.tanh %84 : vector<2x32xf32>
    %86 = arith.mulf %81, %85 : vector<2x32xf32>
    %87 = vector.extract_strided_slice %8 {offsets = [4, 0], sizes = [2, 128], strides = [1, 1]} : vector<16x128xf32> to vector<2x128xf32>
    %cst_23 = arith.constant dense<0.000000e+00> : vector<2x128xf32>
    %88 = tpu.matmul %67, %0, %cst_23 {dimension_numbers = #tpu.dot_dimension_numbers<[1], [0], [0], [1], [0, 0, 1, 1], [], []>} : vector<2x32xf32>, vector<32x128xf32>, vector<2x128xf32> -> vector<2x128xf32>
    %89 = arith.addf %87, %88 : vector<2x128xf32>
    %90 = arith.negf %89 : vector<2x128xf32>
    %91 = math.exp %90 : vector<2x128xf32>
    %cst_24 = arith.constant 1.000000e+00 : f32
    %92 = vector.broadcast %cst_24 : f32 to vector<2x128xf32>
    %93 = arith.addf %92, %91 : vector<2x128xf32>
    %94 = arith.divf %92, %93 : vector<2x128xf32>
    %95 = math.tanh %89 : vector<2x128xf32>
    %96 = vector.extract_strided_slice %94 {offsets = [0, 0], sizes = [2, 32], strides = [1, 1]} : vector<2x128xf32> to vector<2x32xf32>
    %97 = vector.extract_strided_slice %94 {offsets = [0, 32], sizes = [2, 32], strides = [1, 1]} : vector<2x128xf32> to vector<2x32xf32>
    %98 = vector.extract_strided_slice %95 {offsets = [0, 64], sizes = [2, 32], strides = [1, 1]} : vector<2x128xf32> to vector<2x32xf32>
    %99 = vector.extract_strided_slice %94 {offsets = [0, 96], sizes = [2, 32], strides = [1, 1]} : vector<2x128xf32> to vector<2x32xf32>
    %100 = arith.mulf %97, %65 : vector<2x32xf32>
    %101 = arith.mulf %96, %98 : vector<2x32xf32>
    %102 = arith.addf %100, %101 : vector<2x32xf32>
    %103 = math.tanh %102 : vector<2x32xf32>
    %104 = arith.mulf %99, %103 : vector<2x32xf32>
    %105 = tpu.concatenate %104, %86 in 1 : vector<2x32xf32>, vector<2x32xf32> -> vector<2x64xf32>
    %cst_25 = arith.constant dense<0.000000e+00> : vector<2x128xf32>
    %106 = tpu.matmul %105, %1, %cst_25 {dimension_numbers = #tpu.dot_dimension_numbers<[1], [0], [0], [1], [0, 0, 1, 1], [], []>} : vector<2x64xf32>, vector<64x128xf32>, vector<2x128xf32> -> vector<2x128xf32>
    %107 = vector.broadcast %2 : vector<1x128xf32> to vector<2x128xf32>
    %108 = arith.addf %106, %107 : vector<2x128xf32>
    %109 = arith.negf %108 : vector<2x128xf32>
    %110 = math.exp %109 : vector<2x128xf32>
    %cst_26 = arith.constant 1.000000e+00 : f32
    %111 = vector.broadcast %cst_26 : f32 to vector<2x128xf32>
    %112 = arith.addf %111, %110 : vector<2x128xf32>
    %113 = arith.divf %111, %112 : vector<2x128xf32>
    %114 = math.tanh %108 : vector<2x128xf32>
    %115 = vector.extract_strided_slice %113 {offsets = [0, 0], sizes = [2, 32], strides = [1, 1]} : vector<2x128xf32> to vector<2x32xf32>
    %116 = vector.extract_strided_slice %113 {offsets = [0, 32], sizes = [2, 32], strides = [1, 1]} : vector<2x128xf32> to vector<2x32xf32>
    %117 = vector.extract_strided_slice %114 {offsets = [0, 64], sizes = [2, 32], strides = [1, 1]} : vector<2x128xf32> to vector<2x32xf32>
    %118 = vector.extract_strided_slice %113 {offsets = [0, 96], sizes = [2, 32], strides = [1, 1]} : vector<2x128xf32> to vector<2x32xf32>
    %119 = arith.mulf %116, %84 : vector<2x32xf32>
    %120 = arith.mulf %115, %117 : vector<2x32xf32>
    %121 = arith.addf %119, %120 : vector<2x32xf32>
    %122 = math.tanh %121 : vector<2x32xf32>
    %123 = arith.mulf %118, %122 : vector<2x32xf32>
    %124 = vector.extract_strided_slice %8 {offsets = [6, 0], sizes = [2, 128], strides = [1, 1]} : vector<16x128xf32> to vector<2x128xf32>
    %cst_27 = arith.constant dense<0.000000e+00> : vector<2x128xf32>
    %125 = tpu.matmul %104, %0, %cst_27 {dimension_numbers = #tpu.dot_dimension_numbers<[1], [0], [0], [1], [0, 0, 1, 1], [], []>} : vector<2x32xf32>, vector<32x128xf32>, vector<2x128xf32> -> vector<2x128xf32>
    %126 = arith.addf %124, %125 : vector<2x128xf32>
    %127 = arith.negf %126 : vector<2x128xf32>
    %128 = math.exp %127 : vector<2x128xf32>
    %cst_28 = arith.constant 1.000000e+00 : f32
    %129 = vector.broadcast %cst_28 : f32 to vector<2x128xf32>
    %130 = arith.addf %129, %128 : vector<2x128xf32>
    %131 = arith.divf %129, %130 : vector<2x128xf32>
    %132 = math.tanh %126 : vector<2x128xf32>
    %133 = vector.extract_strided_slice %131 {offsets = [0, 0], sizes = [2, 32], strides = [1, 1]} : vector<2x128xf32> to vector<2x32xf32>
    %134 = vector.extract_strided_slice %131 {offsets = [0, 32], sizes = [2, 32], strides = [1, 1]} : vector<2x128xf32> to vector<2x32xf32>
    %135 = vector.extract_strided_slice %132 {offsets = [0, 64], sizes = [2, 32], strides = [1, 1]} : vector<2x128xf32> to vector<2x32xf32>
    %136 = vector.extract_strided_slice %131 {offsets = [0, 96], sizes = [2, 32], strides = [1, 1]} : vector<2x128xf32> to vector<2x32xf32>
    %137 = arith.mulf %134, %102 : vector<2x32xf32>
    %138 = arith.mulf %133, %135 : vector<2x32xf32>
    %139 = arith.addf %137, %138 : vector<2x32xf32>
    %140 = math.tanh %139 : vector<2x32xf32>
    %141 = arith.mulf %136, %140 : vector<2x32xf32>
    %142 = tpu.concatenate %141, %123 in 1 : vector<2x32xf32>, vector<2x32xf32> -> vector<2x64xf32>
    %cst_29 = arith.constant dense<0.000000e+00> : vector<2x128xf32>
    %143 = tpu.matmul %142, %1, %cst_29 {dimension_numbers = #tpu.dot_dimension_numbers<[1], [0], [0], [1], [0, 0, 1, 1], [], []>} : vector<2x64xf32>, vector<64x128xf32>, vector<2x128xf32> -> vector<2x128xf32>
    %144 = vector.broadcast %2 : vector<1x128xf32> to vector<2x128xf32>
    %145 = arith.addf %143, %144 : vector<2x128xf32>
    %146 = arith.negf %145 : vector<2x128xf32>
    %147 = math.exp %146 : vector<2x128xf32>
    %cst_30 = arith.constant 1.000000e+00 : f32
    %148 = vector.broadcast %cst_30 : f32 to vector<2x128xf32>
    %149 = arith.addf %148, %147 : vector<2x128xf32>
    %150 = arith.divf %148, %149 : vector<2x128xf32>
    %151 = math.tanh %145 : vector<2x128xf32>
    %152 = vector.extract_strided_slice %150 {offsets = [0, 0], sizes = [2, 32], strides = [1, 1]} : vector<2x128xf32> to vector<2x32xf32>
    %153 = vector.extract_strided_slice %150 {offsets = [0, 32], sizes = [2, 32], strides = [1, 1]} : vector<2x128xf32> to vector<2x32xf32>
    %154 = vector.extract_strided_slice %151 {offsets = [0, 64], sizes = [2, 32], strides = [1, 1]} : vector<2x128xf32> to vector<2x32xf32>
    %155 = vector.extract_strided_slice %150 {offsets = [0, 96], sizes = [2, 32], strides = [1, 1]} : vector<2x128xf32> to vector<2x32xf32>
    %156 = arith.mulf %153, %121 : vector<2x32xf32>
    %157 = arith.mulf %152, %154 : vector<2x32xf32>
    %158 = arith.addf %156, %157 : vector<2x32xf32>
    %159 = math.tanh %158 : vector<2x32xf32>
    %160 = arith.mulf %155, %159 : vector<2x32xf32>
    %161 = vector.extract_strided_slice %8 {offsets = [8, 0], sizes = [2, 128], strides = [1, 1]} : vector<16x128xf32> to vector<2x128xf32>
    %cst_31 = arith.constant dense<0.000000e+00> : vector<2x128xf32>
    %162 = tpu.matmul %141, %0, %cst_31 {dimension_numbers = #tpu.dot_dimension_numbers<[1], [0], [0], [1], [0, 0, 1, 1], [], []>} : vector<2x32xf32>, vector<32x128xf32>, vector<2x128xf32> -> vector<2x128xf32>
    %163 = arith.addf %161, %162 : vector<2x128xf32>
    %164 = arith.negf %163 : vector<2x128xf32>
    %165 = math.exp %164 : vector<2x128xf32>
    %cst_32 = arith.constant 1.000000e+00 : f32
    %166 = vector.broadcast %cst_32 : f32 to vector<2x128xf32>
    %167 = arith.addf %166, %165 : vector<2x128xf32>
    %168 = arith.divf %166, %167 : vector<2x128xf32>
    %169 = math.tanh %163 : vector<2x128xf32>
    %170 = vector.extract_strided_slice %168 {offsets = [0, 0], sizes = [2, 32], strides = [1, 1]} : vector<2x128xf32> to vector<2x32xf32>
    %171 = vector.extract_strided_slice %168 {offsets = [0, 32], sizes = [2, 32], strides = [1, 1]} : vector<2x128xf32> to vector<2x32xf32>
    %172 = vector.extract_strided_slice %169 {offsets = [0, 64], sizes = [2, 32], strides = [1, 1]} : vector<2x128xf32> to vector<2x32xf32>
    %173 = vector.extract_strided_slice %168 {offsets = [0, 96], sizes = [2, 32], strides = [1, 1]} : vector<2x128xf32> to vector<2x32xf32>
    %174 = arith.mulf %171, %139 : vector<2x32xf32>
    %175 = arith.mulf %170, %172 : vector<2x32xf32>
    %176 = arith.addf %174, %175 : vector<2x32xf32>
    %177 = math.tanh %176 : vector<2x32xf32>
    %178 = arith.mulf %173, %177 : vector<2x32xf32>
    %179 = tpu.concatenate %178, %160 in 1 : vector<2x32xf32>, vector<2x32xf32> -> vector<2x64xf32>
    %cst_33 = arith.constant dense<0.000000e+00> : vector<2x128xf32>
    %180 = tpu.matmul %179, %1, %cst_33 {dimension_numbers = #tpu.dot_dimension_numbers<[1], [0], [0], [1], [0, 0, 1, 1], [], []>} : vector<2x64xf32>, vector<64x128xf32>, vector<2x128xf32> -> vector<2x128xf32>
    %181 = vector.broadcast %2 : vector<1x128xf32> to vector<2x128xf32>
    %182 = arith.addf %180, %181 : vector<2x128xf32>
    %183 = arith.negf %182 : vector<2x128xf32>
    %184 = math.exp %183 : vector<2x128xf32>
    %cst_34 = arith.constant 1.000000e+00 : f32
    %185 = vector.broadcast %cst_34 : f32 to vector<2x128xf32>
    %186 = arith.addf %185, %184 : vector<2x128xf32>
    %187 = arith.divf %185, %186 : vector<2x128xf32>
    %188 = math.tanh %182 : vector<2x128xf32>
    %189 = vector.extract_strided_slice %187 {offsets = [0, 0], sizes = [2, 32], strides = [1, 1]} : vector<2x128xf32> to vector<2x32xf32>
    %190 = vector.extract_strided_slice %187 {offsets = [0, 32], sizes = [2, 32], strides = [1, 1]} : vector<2x128xf32> to vector<2x32xf32>
    %191 = vector.extract_strided_slice %188 {offsets = [0, 64], sizes = [2, 32], strides = [1, 1]} : vector<2x128xf32> to vector<2x32xf32>
    %192 = vector.extract_strided_slice %187 {offsets = [0, 96], sizes = [2, 32], strides = [1, 1]} : vector<2x128xf32> to vector<2x32xf32>
    %193 = arith.mulf %190, %158 : vector<2x32xf32>
    %194 = arith.mulf %189, %191 : vector<2x32xf32>
    %195 = arith.addf %193, %194 : vector<2x32xf32>
    %196 = math.tanh %195 : vector<2x32xf32>
    %197 = arith.mulf %192, %196 : vector<2x32xf32>
    %198 = vector.extract_strided_slice %8 {offsets = [10, 0], sizes = [2, 128], strides = [1, 1]} : vector<16x128xf32> to vector<2x128xf32>
    %cst_35 = arith.constant dense<0.000000e+00> : vector<2x128xf32>
    %199 = tpu.matmul %178, %0, %cst_35 {dimension_numbers = #tpu.dot_dimension_numbers<[1], [0], [0], [1], [0, 0, 1, 1], [], []>} : vector<2x32xf32>, vector<32x128xf32>, vector<2x128xf32> -> vector<2x128xf32>
    %200 = arith.addf %198, %199 : vector<2x128xf32>
    %201 = arith.negf %200 : vector<2x128xf32>
    %202 = math.exp %201 : vector<2x128xf32>
    %cst_36 = arith.constant 1.000000e+00 : f32
    %203 = vector.broadcast %cst_36 : f32 to vector<2x128xf32>
    %204 = arith.addf %203, %202 : vector<2x128xf32>
    %205 = arith.divf %203, %204 : vector<2x128xf32>
    %206 = math.tanh %200 : vector<2x128xf32>
    %207 = vector.extract_strided_slice %205 {offsets = [0, 0], sizes = [2, 32], strides = [1, 1]} : vector<2x128xf32> to vector<2x32xf32>
    %208 = vector.extract_strided_slice %205 {offsets = [0, 32], sizes = [2, 32], strides = [1, 1]} : vector<2x128xf32> to vector<2x32xf32>
    %209 = vector.extract_strided_slice %206 {offsets = [0, 64], sizes = [2, 32], strides = [1, 1]} : vector<2x128xf32> to vector<2x32xf32>
    %210 = vector.extract_strided_slice %205 {offsets = [0, 96], sizes = [2, 32], strides = [1, 1]} : vector<2x128xf32> to vector<2x32xf32>
    %211 = arith.mulf %208, %176 : vector<2x32xf32>
    %212 = arith.mulf %207, %209 : vector<2x32xf32>
    %213 = arith.addf %211, %212 : vector<2x32xf32>
    %214 = math.tanh %213 : vector<2x32xf32>
    %215 = arith.mulf %210, %214 : vector<2x32xf32>
    %216 = tpu.concatenate %215, %197 in 1 : vector<2x32xf32>, vector<2x32xf32> -> vector<2x64xf32>
    %cst_37 = arith.constant dense<0.000000e+00> : vector<2x128xf32>
    %217 = tpu.matmul %216, %1, %cst_37 {dimension_numbers = #tpu.dot_dimension_numbers<[1], [0], [0], [1], [0, 0, 1, 1], [], []>} : vector<2x64xf32>, vector<64x128xf32>, vector<2x128xf32> -> vector<2x128xf32>
    %218 = vector.broadcast %2 : vector<1x128xf32> to vector<2x128xf32>
    %219 = arith.addf %217, %218 : vector<2x128xf32>
    %220 = arith.negf %219 : vector<2x128xf32>
    %221 = math.exp %220 : vector<2x128xf32>
    %cst_38 = arith.constant 1.000000e+00 : f32
    %222 = vector.broadcast %cst_38 : f32 to vector<2x128xf32>
    %223 = arith.addf %222, %221 : vector<2x128xf32>
    %224 = arith.divf %222, %223 : vector<2x128xf32>
    %225 = math.tanh %219 : vector<2x128xf32>
    %226 = vector.extract_strided_slice %224 {offsets = [0, 0], sizes = [2, 32], strides = [1, 1]} : vector<2x128xf32> to vector<2x32xf32>
    %227 = vector.extract_strided_slice %224 {offsets = [0, 32], sizes = [2, 32], strides = [1, 1]} : vector<2x128xf32> to vector<2x32xf32>
    %228 = vector.extract_strided_slice %225 {offsets = [0, 64], sizes = [2, 32], strides = [1, 1]} : vector<2x128xf32> to vector<2x32xf32>
    %229 = vector.extract_strided_slice %224 {offsets = [0, 96], sizes = [2, 32], strides = [1, 1]} : vector<2x128xf32> to vector<2x32xf32>
    %230 = arith.mulf %227, %195 : vector<2x32xf32>
    %231 = arith.mulf %226, %228 : vector<2x32xf32>
    %232 = arith.addf %230, %231 : vector<2x32xf32>
    %233 = math.tanh %232 : vector<2x32xf32>
    %234 = arith.mulf %229, %233 : vector<2x32xf32>
    %235 = vector.extract_strided_slice %8 {offsets = [12, 0], sizes = [2, 128], strides = [1, 1]} : vector<16x128xf32> to vector<2x128xf32>
    %cst_39 = arith.constant dense<0.000000e+00> : vector<2x128xf32>
    %236 = tpu.matmul %215, %0, %cst_39 {dimension_numbers = #tpu.dot_dimension_numbers<[1], [0], [0], [1], [0, 0, 1, 1], [], []>} : vector<2x32xf32>, vector<32x128xf32>, vector<2x128xf32> -> vector<2x128xf32>
    %237 = arith.addf %235, %236 : vector<2x128xf32>
    %238 = arith.negf %237 : vector<2x128xf32>
    %239 = math.exp %238 : vector<2x128xf32>
    %cst_40 = arith.constant 1.000000e+00 : f32
    %240 = vector.broadcast %cst_40 : f32 to vector<2x128xf32>
    %241 = arith.addf %240, %239 : vector<2x128xf32>
    %242 = arith.divf %240, %241 : vector<2x128xf32>
    %243 = math.tanh %237 : vector<2x128xf32>
    %244 = vector.extract_strided_slice %242 {offsets = [0, 0], sizes = [2, 32], strides = [1, 1]} : vector<2x128xf32> to vector<2x32xf32>
    %245 = vector.extract_strided_slice %242 {offsets = [0, 32], sizes = [2, 32], strides = [1, 1]} : vector<2x128xf32> to vector<2x32xf32>
    %246 = vector.extract_strided_slice %243 {offsets = [0, 64], sizes = [2, 32], strides = [1, 1]} : vector<2x128xf32> to vector<2x32xf32>
    %247 = vector.extract_strided_slice %242 {offsets = [0, 96], sizes = [2, 32], strides = [1, 1]} : vector<2x128xf32> to vector<2x32xf32>
    %248 = arith.mulf %245, %213 : vector<2x32xf32>
    %249 = arith.mulf %244, %246 : vector<2x32xf32>
    %250 = arith.addf %248, %249 : vector<2x32xf32>
    %251 = math.tanh %250 : vector<2x32xf32>
    %252 = arith.mulf %247, %251 : vector<2x32xf32>
    %253 = tpu.concatenate %252, %234 in 1 : vector<2x32xf32>, vector<2x32xf32> -> vector<2x64xf32>
    %cst_41 = arith.constant dense<0.000000e+00> : vector<2x128xf32>
    %254 = tpu.matmul %253, %1, %cst_41 {dimension_numbers = #tpu.dot_dimension_numbers<[1], [0], [0], [1], [0, 0, 1, 1], [], []>} : vector<2x64xf32>, vector<64x128xf32>, vector<2x128xf32> -> vector<2x128xf32>
    %255 = vector.broadcast %2 : vector<1x128xf32> to vector<2x128xf32>
    %256 = arith.addf %254, %255 : vector<2x128xf32>
    %257 = arith.negf %256 : vector<2x128xf32>
    %258 = math.exp %257 : vector<2x128xf32>
    %cst_42 = arith.constant 1.000000e+00 : f32
    %259 = vector.broadcast %cst_42 : f32 to vector<2x128xf32>
    %260 = arith.addf %259, %258 : vector<2x128xf32>
    %261 = arith.divf %259, %260 : vector<2x128xf32>
    %262 = math.tanh %256 : vector<2x128xf32>
    %263 = vector.extract_strided_slice %261 {offsets = [0, 0], sizes = [2, 32], strides = [1, 1]} : vector<2x128xf32> to vector<2x32xf32>
    %264 = vector.extract_strided_slice %261 {offsets = [0, 32], sizes = [2, 32], strides = [1, 1]} : vector<2x128xf32> to vector<2x32xf32>
    %265 = vector.extract_strided_slice %262 {offsets = [0, 64], sizes = [2, 32], strides = [1, 1]} : vector<2x128xf32> to vector<2x32xf32>
    %266 = vector.extract_strided_slice %261 {offsets = [0, 96], sizes = [2, 32], strides = [1, 1]} : vector<2x128xf32> to vector<2x32xf32>
    %267 = arith.mulf %264, %232 : vector<2x32xf32>
    %268 = arith.mulf %263, %265 : vector<2x32xf32>
    %269 = arith.addf %267, %268 : vector<2x32xf32>
    %270 = math.tanh %269 : vector<2x32xf32>
    %271 = arith.mulf %266, %270 : vector<2x32xf32>
    %272 = vector.extract_strided_slice %8 {offsets = [14, 0], sizes = [2, 128], strides = [1, 1]} : vector<16x128xf32> to vector<2x128xf32>
    %cst_43 = arith.constant dense<0.000000e+00> : vector<2x128xf32>
    %273 = tpu.matmul %252, %0, %cst_43 {dimension_numbers = #tpu.dot_dimension_numbers<[1], [0], [0], [1], [0, 0, 1, 1], [], []>} : vector<2x32xf32>, vector<32x128xf32>, vector<2x128xf32> -> vector<2x128xf32>
    %274 = arith.addf %272, %273 : vector<2x128xf32>
    %275 = arith.negf %274 : vector<2x128xf32>
    %276 = math.exp %275 : vector<2x128xf32>
    %cst_44 = arith.constant 1.000000e+00 : f32
    %277 = vector.broadcast %cst_44 : f32 to vector<2x128xf32>
    %278 = arith.addf %277, %276 : vector<2x128xf32>
    %279 = arith.divf %277, %278 : vector<2x128xf32>
    %280 = math.tanh %274 : vector<2x128xf32>
    %281 = vector.extract_strided_slice %279 {offsets = [0, 0], sizes = [2, 32], strides = [1, 1]} : vector<2x128xf32> to vector<2x32xf32>
    %282 = vector.extract_strided_slice %279 {offsets = [0, 32], sizes = [2, 32], strides = [1, 1]} : vector<2x128xf32> to vector<2x32xf32>
    %283 = vector.extract_strided_slice %280 {offsets = [0, 64], sizes = [2, 32], strides = [1, 1]} : vector<2x128xf32> to vector<2x32xf32>
    %284 = vector.extract_strided_slice %279 {offsets = [0, 96], sizes = [2, 32], strides = [1, 1]} : vector<2x128xf32> to vector<2x32xf32>
    %285 = arith.mulf %282, %250 : vector<2x32xf32>
    %286 = arith.mulf %281, %283 : vector<2x32xf32>
    %287 = arith.addf %285, %286 : vector<2x32xf32>
    %288 = math.tanh %287 : vector<2x32xf32>
    %289 = arith.mulf %284, %288 : vector<2x32xf32>
    %290 = tpu.concatenate %289, %271 in 1 : vector<2x32xf32>, vector<2x32xf32> -> vector<2x64xf32>
    %cst_45 = arith.constant dense<0.000000e+00> : vector<2x128xf32>
    %291 = tpu.matmul %290, %1, %cst_45 {dimension_numbers = #tpu.dot_dimension_numbers<[1], [0], [0], [1], [0, 0, 1, 1], [], []>} : vector<2x64xf32>, vector<64x128xf32>, vector<2x128xf32> -> vector<2x128xf32>
    %292 = vector.broadcast %2 : vector<1x128xf32> to vector<2x128xf32>
    %293 = arith.addf %291, %292 : vector<2x128xf32>
    %294 = arith.negf %293 : vector<2x128xf32>
    %295 = math.exp %294 : vector<2x128xf32>
    %cst_46 = arith.constant 1.000000e+00 : f32
    %296 = vector.broadcast %cst_46 : f32 to vector<2x128xf32>
    %297 = arith.addf %296, %295 : vector<2x128xf32>
    %298 = arith.divf %296, %297 : vector<2x128xf32>
    %299 = math.tanh %293 : vector<2x128xf32>
    %300 = vector.extract_strided_slice %298 {offsets = [0, 0], sizes = [2, 32], strides = [1, 1]} : vector<2x128xf32> to vector<2x32xf32>
    %301 = vector.extract_strided_slice %298 {offsets = [0, 32], sizes = [2, 32], strides = [1, 1]} : vector<2x128xf32> to vector<2x32xf32>
    %302 = vector.extract_strided_slice %299 {offsets = [0, 64], sizes = [2, 32], strides = [1, 1]} : vector<2x128xf32> to vector<2x32xf32>
    %303 = vector.extract_strided_slice %298 {offsets = [0, 96], sizes = [2, 32], strides = [1, 1]} : vector<2x128xf32> to vector<2x32xf32>
    %304 = arith.mulf %301, %269 : vector<2x32xf32>
    %305 = arith.mulf %300, %302 : vector<2x32xf32>
    %306 = arith.addf %304, %305 : vector<2x32xf32>
    %307 = math.tanh %306 : vector<2x32xf32>
    %308 = arith.mulf %303, %307 : vector<2x32xf32>
    %c0_47 = arith.constant 0 : index
    %c0_48 = arith.constant 0 : index
    %309 = vector.load %arg6[%c0_47, %c0_48] : memref<32x7xf32, #tpu.memory_space<vmem>>, vector<32x7xf32>
    %cst_49 = arith.constant dense<0.000000e+00> : vector<2x7xf32>
    %310 = tpu.matmul %308, %309, %cst_49 {dimension_numbers = #tpu.dot_dimension_numbers<[1], [0], [0], [1], [0, 0, 1, 1], [], []>} : vector<2x32xf32>, vector<32x7xf32>, vector<2x7xf32> -> vector<2x7xf32>
    %c0_50 = arith.constant 0 : index
    %c0_51 = arith.constant 0 : index
    %311 = vector.load %arg7[%c0_50, %c0_51] : memref<1x7xf32, #tpu.memory_space<vmem>>, vector<1x7xf32>
    %312 = vector.broadcast %311 : vector<1x7xf32> to vector<2x7xf32>
    %313 = arith.addf %310, %312 : vector<2x7xf32>
    %c0_52 = arith.constant 0 : index
    %c0_53 = arith.constant 0 : index
    %314 = vector.load %arg8[%c0_52, %c0_53] : memref<2x7xf32, #tpu.memory_space<vmem>>, vector<2x7xf32>
    tpu.vector_store %arg8[%c0_52, %c0_53], %313 {strides = array<i32>} : memref<2x7xf32, #tpu.memory_space<vmem>>, vector<2x7xf32>,
    return
  }
}

</mosaic_0001>

<llo_original>
// kernel: tpu_custom_call.1
$region0: #{tpu_custom_call.1}
  #allocation0 [shape = 'u32[]', space=smem, size = 0x4, offset = 0x4, fixed_abs, tag = 'smem constant byte address 0x4 - core index']
  #allocation1 [shape = 'u32[144,128]{1,0:T(1,128)}', space=vmem, size = 0x12000, scoped, tag = 'internal scratch']
  %s0 = inlined_call_operand.vmem [shape: f32[16,7], index: 0, kind: input, shape index: {}]
  %s1 = inlined_call_operand.vmem [shape: f32[7,128], index: 1, kind: input, shape index: {}]
  %s2 = inlined_call_operand.hbm [shape: f32[32,128], index: 2, kind: input, shape index: {}]
  %s3 = inlined_call_operand.vmem [shape: f32[1,128], index: 3, kind: input, shape index: {}]
  %s4 = inlined_call_operand.vmem [shape: f32[64,128], index: 4, kind: input, shape index: {}]
  %s5 = inlined_call_operand.vmem [shape: f32[1,128], index: 5, kind: input, shape index: {}]
  %s6 = inlined_call_operand.vmem [shape: f32[32,7], index: 6, kind: input, shape index: {}]
  %s7 = inlined_call_operand.vmem [shape: f32[1,7], index: 7, kind: input, shape index: {}]
  %s8 = inlined_call_operand.hbm [shape: f32[2,7], index: 8, kind: output, shape index: {}]
  %s9 = sld [smem:[#allocation0]]
  $region46: #{tpu_custom_call.1} parent=0
    _
  %s11 = ssub.s32 1, %s9
  %s12 = scalar_select 0, %s11, %s9
  $region1: #{tpu_custom_call.1} parent=0
    #allocation2 [shape = 'u8[16384]{0}', space=vmem, size = 0x4000, scoped, tag = 'input window, operand 2, single buffered']
    #allocation3 [shape = 's32[1]{0}', space=sflag, size = 0x4, scoped, tag = 'scoped memory for tpu_custom_call.1']
    #allocation4 [shape = 's32[1]{0}', space=sflag, size = 0x4, scoped, tag = 'scoped memory for tpu_custom_call.1']
    #allocation5 [shape = 'u8[1024]{0}', space=vmem, size = 0x400, scoped, tag = 'output window, operand 0, single buffered']
    %13 = vsyncpa [#allocation3], 0
    %14 = vsyncpa [#allocation4], 0
    // Predicated region
    $region2: #{tpu_custom_call.1} parent=1 // pred_check
      _
    $region3: #{tpu_custom_call.1} parent=1 // pred_check_branch
      %16 = sbr.rel (0) target = $region5
    $region4: #{tpu_custom_call.1} parent=1 // pred_region
      _
    $region5: #{tpu_custom_call.1} parent=1 // pred_fallthru
      _
    // Predicated region
    $region6: #{tpu_custom_call.1} parent=1 // pred_check
      _
    $region7: #{tpu_custom_call.1} parent=1 // pred_check_branch
      %18 = sbr.rel (0) target = $region9
    $region8: #{tpu_custom_call.1} parent=1 // pred_region
      _
    $region9: #{tpu_custom_call.1} parent=1 // pred_fallthru
      _
    // Predicated region
    $region10: #{tpu_custom_call.1} parent=1 // pred_check
      _
    $region11: #{tpu_custom_call.1} parent=1 // pred_check_branch
      %20 = sbr.rel (0) target = $region13
    $region12: #{tpu_custom_call.1} parent=1 // pred_region
      %s22 = ssub.s32 512, 512
      %23 = vsyncadd [#allocation3], %s22
      %s24 = sshll.u32 [#allocation2], 4
      %s25 = int_to_ptr.vmem [resolvable:$true] %s24
      %30 = dma.hbm_to_vmem [thread:$0]  %s2, 512, %s25, [#allocation3], 128, 128, 8
    $region13: #{tpu_custom_call.1} parent=1 // pred_fallthru
      _
    // Predicated region
    $region14: #{tpu_custom_call.1} parent=1 // pred_check
      _
    $region15: #{tpu_custom_call.1} parent=1 // pred_check_branch
      %32 = sbr.rel (0) target = $region17
    $region16: #{tpu_custom_call.1} parent=1 // pred_region
      _
    $region17: #{tpu_custom_call.1} parent=1 // pred_fallthru
      _
    // Predicated region
    $region18: #{tpu_custom_call.1} parent=1 // pred_check
      _
    $region19: #{tpu_custom_call.1} parent=1 // pred_check_branch
      %34 = sbr.rel (0) target = $region21
    $region20: #{tpu_custom_call.1} parent=1 // pred_region
      _
    $region21: #{tpu_custom_call.1} parent=1 // pred_fallthru
      _
    // Predicated region
    $region22: #{tpu_custom_call.1} parent=1 // pred_check
      _
    $region23: #{tpu_custom_call.1} parent=1 // pred_check_branch
      %36 = sbr.rel (0) target = $region25
    $region24: #{tpu_custom_call.1} parent=1 // pred_region
      _
    $region25: #{tpu_custom_call.1} parent=1 // pred_fallthru
      _
    // Predicated region
    $region26: #{tpu_custom_call.1} parent=1 // pred_check
      _
    $region27: #{tpu_custom_call.1} parent=1 // pred_check_branch
      %38 = sbr.rel (0) target = $region29
    $region28: #{tpu_custom_call.1} parent=1 // pred_region
      _
    $region29: #{tpu_custom_call.1} parent=1 // pred_fallthru
      _
    // Predicated region
    $region30: #{tpu_custom_call.1} parent=1 // pred_check
      _
    $region31: #{tpu_custom_call.1} parent=1 // pred_check_branch
      %40 = sbr.rel (0) target = $region33
    $region32: #{tpu_custom_call.1} parent=1 // pred_region
      _
    $region33: #{tpu_custom_call.1} parent=1 // pred_fallthru
      _
    // Predicated region
    $region34: #{tpu_custom_call.1} parent=1 // pred_check
      _
    $region35: #{tpu_custom_call.1} parent=1 // pred_check_branch
      %42 = sbr.rel (0) target = $region37
    $region36: #{tpu_custom_call.1} parent=1 // pred_region
      %43 = dma.done [#allocation3], 512
    $region37: #{tpu_custom_call.1} parent=1 // pred_fallthru
      _
    %v44 = vld [vmem:[#allocation2] sm:$0xff]
    %v45 = vld [vmem:[#allocation2 + $0x8] sm:$0xff]
    %v46 = vld [vmem:[#allocation2 + $0x10] sm:$0xff]
    %v47 = vld [vmem:[#allocation2 + $0x18] sm:$0xff]
    %v48 = vld [vmem:[%s4] sm:$0xff]
    %v49 = vld [vmem:[%s4 + $0x8] sm:$0xff]
    %v50 = vld [vmem:[%s4 + $0x10] sm:$0xff]
    %v51 = vld [vmem:[%s4 + $0x18] sm:$0xff]
    %v52 = vld [vmem:[%s4 + $0x20] sm:$0xff]
    %v53 = vld [vmem:[%s4 + $0x28] sm:$0xff]
    %v54 = vld [vmem:[%s4 + $0x30] sm:$0xff]
    %v55 = vld [vmem:[%s4 + $0x38] sm:$0xff]
    %v56 = vld [vmem:[%s5] sm:$0x1]
    %v57 = vld [vmem:[%s0] sm:$0xff]
    %v58 = vld [vmem:[%s0 + $0x8] sm:$0xff]
    %v59 = vld [vmem:[%s1] sm:$0x7f]
    %v60 = vld [vmem:[%s3] sm:$0x1]
    %v62 = vlaneseq
    %v63 = vshrl.u32 %v62, 7
    %v64 = vsub.s32 0, %v63
    %v65 = vrot.slane %v60, %v64
    %vm67 = vcmask 56320
    %v69 = vsel %vm67, %v57, 0
    %v72 = vsel %vm67, %v58, 0
    %vm74 = vcmask 1046528
    %v76 = vsel %vm74, %v59, 0
    %78 = vmatprep.subr.mxu0 0.0
    %79 = vmatpush1.msra.mxu0 %v76
    %80 = vmatprep.subr.mxu0 0.0
    %81 = vmatpush1.msra.mxu0 0.0
    %82 = vmatprep.subr.mxu0 0.0
    %83 = vmatpush1.msra.mxu0 0.0
    %84 = vmatprep.subr.mxu0 0.0
    %85 = vmatpush1.msra.mxu0 0.0
    %86 = vmatprep.subr.mxu0 0.0
    %87 = vmatpush1.msra.mxu0 0.0
    %88 = vmatprep.subr.mxu0 0.0
    %89 = vmatpush1.msra.mxu0 0.0
    %90 = vmatprep.subr.mxu0 0.0
    %91 = vmatpush1.msra.mxu0 0.0
    %92 = vmatprep.subr.mxu0 0.0
    %93 = vmatpush1.msra.mxu0 0.0
    %94 = vmatprep.subr.mxu0 0.0
    %95 = vmatpush1.msra.mxu0 0.0
    %96 = vmatprep.subr.mxu0 0.0
    %97 = vmatpush1.msra.mxu0 0.0
    %98 = vmatprep.subr.mxu0 0.0
    %99 = vmatpush1.msra.mxu0 0.0
    %100 = vmatprep.subr.mxu0 0.0
    %101 = vmatpush1.msra.mxu0 0.0
    %102 = vmatprep.subr.mxu0 0.0
    %103 = vmatpush1.msra.mxu0 0.0
    %104 = vmatprep.subr.mxu0 0.0
    %105 = vmatpush1.msra.mxu0 0.0
    %106 = vmatprep.subr.mxu0 0.0
    %107 = vmatpush1.msra.mxu0 0.0
    %108 = vmatprep.subr.mxu0 0.0
    %109 = vmatpush1.msra.mxu0 0.0
    %110 = vmatprep.subr.mxu0 0.0
    %111 = vmatpush1.msra.mxu0 0.0
    %112 = vmatprep.subr.mxu0 0.0
    %113 = vmatpush1.msra.mxu0 0.0
    %114 = vmatprep.subr.mxu0 0.0
    %115 = vmatpush1.msra.mxu0 0.0
    %116 = vmatprep.subr.mxu0 0.0
    %117 = vmatpush1.msra.mxu0 0.0
    %118 = vmatprep.subr.mxu0 0.0
    %119 = vmatpush1.msra.mxu0 0.0
    %120 = vmatprep.subr.mxu0 0.0
    %121 = vmatpush1.msra.mxu0 0.0
    %122 = vmatprep.subr.mxu0 0.0
    %123 = vmatpush1.msra.mxu0 0.0
    %124 = vmatprep.subr.mxu0 0.0
    %125 = vmatpush1.msra.mxu0 0.0
    %126 = vmatprep.subr.mxu0 0.0
    %127 = vmatpush1.msra.mxu0 0.0
    %128 = vmatprep.subr.mxu0 0.0
    %129 = vmatpush1.msra.mxu0 0.0
    %130 = vmatprep.subr.mxu0 0.0
    %131 = vmatpush1.msra.mxu0 0.0
    %132 = vmatprep.subr.mxu0 0.0
    %133 = vmatpush1.msra.mxu0 0.0
    %134 = vmatprep.subr.mxu0 0.0
    %135 = vmatpush1.msra.mxu0 0.0
    %136 = vmatprep.subr.mxu0 0.0
    %137 = vmatpush1.msra.mxu0 0.0
    %138 = vmatprep.subr.mxu0 0.0
    %139 = vmatpush1.msra.mxu0 0.0
    %140 = vmatprep.subr.mxu0 0.0
    %141 = vmatpush1.msra.mxu0 0.0
    %142 = vmatprep.mubr.f32.mxu0 0.0
    %143 = vmatmul.mubr.f32.gmra.mrb[0].mxu0 %v69
    %v144 = vpop.f32.mrb[0].mxu0
    %v145 = vadd.f32 %v65, %v144
    %v146 = vpop.f32.mrb[0].mxu0
    %147 = vmatprep.mubr.f32.mxu0 0.0
    %148 = vmatmul.mubr.f32.gmra.mrb[0].mxu0 %v72
    %v149 = vpop.f32.mrb[0].mxu0
    %v150 = vadd.f32 %v65, %v149
    %v151 = vpop.f32.mrb[0].mxu0
    %152 = vdwg.mxu0
    %vm153 = vcmask 261120
    %v155 = vsel %vm153, 0.0, 0
    %157 = vmatprep.subr.mxu0 0.0
    %158 = vmatpush1.msra.mxu0 %v44
    %159 = vmatprep.subr.mxu0 0.0
    %160 = vmatpush1.msra.mxu0 %v45
    %161 = vmatprep.subr.mxu0 0.0
    %162 = vmatpush1.msra.mxu0 %v46
    %163 = vmatprep.subr.mxu0 0.0
    %164 = vmatpush1.msra.mxu0 %v47
    %165 = vmatprep.subr.mxu0 0.0
    %166 = vmatpush1.msra.mxu0 0.0
    %167 = vmatprep.subr.mxu0 0.0
    %168 = vmatpush1.msra.mxu0 0.0
    %169 = vmatprep.subr.mxu0 0.0
    %170 = vmatpush1.msra.mxu0 0.0
    %171 = vmatprep.subr.mxu0 0.0
    %172 = vmatpush1.msra.mxu0 0.0
    %173 = vmatprep.subr.mxu0 0.0
    %174 = vmatpush1.msra.mxu0 0.0
    %175 = vmatprep.subr.mxu0 0.0
    %176 = vmatpush1.msra.mxu0 0.0
    %177 = vmatprep.subr.mxu0 0.0
    %178 = vmatpush1.msra.mxu0 0.0
    %179 = vmatprep.subr.mxu0 0.0
    %180 = vmatpush1.msra.mxu0 0.0
    %181 = vmatprep.subr.mxu0 0.0
    %182 = vmatpush1.msra.mxu0 0.0
    %183 = vmatprep.subr.mxu0 0.0
    %184 = vmatpush1.msra.mxu0 0.0
    %185 = vmatprep.subr.mxu0 0.0
    %186 = vmatpush1.msra.mxu0 0.0
    %187 = vmatprep.subr.mxu0 0.0
    %188 = vmatpush1.msra.mxu0 0.0
    %189 = vmatprep.subr.mxu0 0.0
    %190 = vmatpush1.msra.mxu0 0.0
    %191 = vmatprep.subr.mxu0 0.0
    %192 = vmatpush1.msra.mxu0 0.0
    %193 = vmatprep.subr.mxu0 0.0
    %194 = vmatpush1.msra.mxu0 0.0
    %195 = vmatprep.subr.mxu0 0.0
    %196 = vmatpush1.msra.mxu0 0.0
    %197 = vmatprep.subr.mxu0 0.0
    %198 = vmatpush1.msra.mxu0 0.0
    %199 = vmatprep.subr.mxu0 0.0
    %200 = vmatpush1.msra.mxu0 0.0
    %201 = vmatprep.subr.mxu0 0.0
    %202 = vmatpush1.msra.mxu0 0.0
    %203 = vmatprep.subr.mxu0 0.0
    %204 = vmatpush1.msra.mxu0 0.0
    %205 = vmatprep.subr.mxu0 0.0
    %206 = vmatpush1.msra.mxu0 0.0
    %207 = vmatprep.subr.mxu0 0.0
    %208 = vmatpush1.msra.mxu0 0.0
    %209 = vmatprep.subr.mxu0 0.0
    %210 = vmatpush1.msra.mxu0 0.0
    %211 = vmatprep.subr.mxu0 0.0
    %212 = vmatpush1.msra.mxu0 0.0
    %213 = vmatprep.subr.mxu0 0.0
    %214 = vmatpush1.msra.mxu0 0.0
    %215 = vmatprep.subr.mxu0 0.0
    %216 = vmatpush1.msra.mxu0 0.0
    %217 = vmatprep.subr.mxu0 0.0
    %218 = vmatpush1.msra.mxu0 0.0
    %219 = vmatprep.subr.mxu0 0.0
    %220 = vmatpush1.msra.mxu0 0.0
    %221 = vmatprep.mubr.f32.mxu0 0.0
    %222 = vmatmul.mubr.f32.gmra.mrb[0].mxu0 %v155
    %v223 = vpop.f32.mrb[0].mxu0
    %v224 = vadd.f32 0.0, %v223
    %v225 = vpop.f32.mrb[0].mxu0
    %226 = vdwg.mxu0
    %v227 = vadd.f32 %v145, %v224
    %v228 = vxor.u32 %v227, 2147483648
    %v229 = vmul.f32 %v228, 1.442695
    %v230 = vpow.pop %v229
    %v231 = vadd.f32 %v230, 1.0
    %v232 = vrcp.pop %v231
    %v233 = vmul.f32 1.0, %v232
    %v234 = vtanh.pop %v227
    %v235 = vmul.f32 %v233, 0.0
    %237 = vrot.lane.b32.xlu0 %v234, 64
    %v238 = vpop.permute.xlu0 %237
    %v240 = vmul.f32 %v233, %v238
    %242 = vrot.lane.b32.xlu0 %v240, 32
    %v243 = vpop.permute.xlu0 %242
    %v245 = vadd.f32 %v235, %v243
    %v246 = vtanh.pop %v245
    %248 = vrot.lane.b32.xlu0 %v246, 64
    %v249 = vpop.permute.xlu0 %248
    %v251 = vmul.f32 %v233, %v249
    %253 = vrot.lane.b32.xlu0 %v251, 32
    %v254 = vpop.permute.xlu0 %253
    %v256 = vsel %vm153, %v254, 0.0
    %v258 = vlaneseq
    %v259 = vshrl.u32 %v258, 7
    %v260 = vsub.s32 0, %v259
    %v261 = vrot.slane %v56, %v260
    %vm263 = vcmask 523264
    %v265 = vsel %vm263, %v256, 0
    %267 = vmatprep.subr.mxu0 0.0
    %268 = vmatpush1.msra.mxu0 %v48
    %269 = vmatprep.subr.mxu0 0.0
    %270 = vmatpush1.msra.mxu0 %v49
    %271 = vmatprep.subr.mxu0 0.0
    %272 = vmatpush1.msra.mxu0 %v50
    %273 = vmatprep.subr.mxu0 0.0
    %274 = vmatpush1.msra.mxu0 %v51
    %275 = vmatprep.subr.mxu0 0.0
    %276 = vmatpush1.msra.mxu0 %v52
    %277 = vmatprep.subr.mxu0 0.0
    %278 = vmatpush1.msra.mxu0 %v53
    %279 = vmatprep.subr.mxu0 0.0
    %280 = vmatpush1.msra.mxu0 %v54
    %281 = vmatprep.subr.mxu0 0.0
    %282 = vmatpush1.msra.mxu0 %v55
    %283 = vmatprep.subr.mxu0 0.0
    %284 = vmatpush1.msra.mxu0 0.0
    %285 = vmatprep.subr.mxu0 0.0
    %286 = vmatpush1.msra.mxu0 0.0
    %287 = vmatprep.subr.mxu0 0.0
    %288 = vmatpush1.msra.mxu0 0.0
    %289 = vmatprep.subr.mxu0 0.0
    %290 = vmatpush1.msra.mxu0 0.0
    %291 = vmatprep.subr.mxu0 0.0
    %292 = vmatpush1.msra.mxu0 0.0
    %293 = vmatprep.subr.mxu0 0.0
    %294 = vmatpush1.msra.mxu0 0.0
    %295 = vmatprep.subr.mxu0 0.0
    %296 = vmatpush1.msra.mxu0 0.0
    %297 = vmatprep.subr.mxu0 0.0
    %298 = vmatpush1.msra.mxu0 0.0
    %299 = vmatprep.subr.mxu0 0.0
    %300 = vmatpush1.msra.mxu0 0.0
    %301 = vmatprep.subr.mxu0 0.0
    %302 = vmatpush1.msra.mxu0 0.0
    %303 = vmatprep.subr.mxu0 0.0
    %304 = vmatpush1.msra.mxu0 0.0
    %305 = vmatprep.subr.mxu0 0.0
    %306 = vmatpush1.msra.mxu0 0.0
    %307 = vmatprep.subr.mxu0 0.0
    %308 = vmatpush1.msra.mxu0 0.0
    %309 = vmatprep.subr.mxu0 0.0
    %310 = vmatpush1.msra.mxu0 0.0
    %311 = vmatprep.subr.mxu0 0.0
    %312 = vmatpush1.msra.mxu0 0.0
    %313 = vmatprep.subr.mxu0 0.0
    %314 = vmatpush1.msra.mxu0 0.0
    %315 = vmatprep.subr.mxu0 0.0
    %316 = vmatpush1.msra.mxu0 0.0
    %317 = vmatprep.subr.mxu0 0.0
    %318 = vmatpush1.msra.mxu0 0.0
    %319 = vmatprep.subr.mxu0 0.0
    %320 = vmatpush1.msra.mxu0 0.0
    %321 = vmatprep.subr.mxu0 0.0
    %322 = vmatpush1.msra.mxu0 0.0
    %323 = vmatprep.subr.mxu0 0.0
    %324 = vmatpush1.msra.mxu0 0.0
    %325 = vmatprep.subr.mxu0 0.0
    %326 = vmatpush1.msra.mxu0 0.0
    %327 = vmatprep.subr.mxu0 0.0
    %328 = vmatpush1.msra.mxu0 0.0
    %329 = vmatprep.subr.mxu0 0.0
    %330 = vmatpush1.msra.mxu0 0.0
    %331 = vmatprep.mubr.f32.mxu0 0.0
    %332 = vmatmul.mubr.f32.gmra.mrb[0].mxu0 %v265
    %v333 = vpop.f32.mrb[0].mxu0
    %v334 = vadd.f32 %v261, %v333
    %v335 = vpop.f32.mrb[0].mxu0
    %336 = vdwg.mxu0
    %v337 = vxor.u32 %v334, 2147483648
    %v338 = vmul.f32 %v337, 1.442695
    %v339 = vpow.pop %v338
    %v340 = vadd.f32 %v339, 1.0
    %v341 = vrcp.pop %v340
    %v342 = vmul.f32 1.0, %v341
    %v343 = vtanh.pop %v334
    %v344 = vmul.f32 %v342, 0.0
    %346 = vrot.lane.b32.xlu0 %v343, 64
    %v347 = vpop.permute.xlu0 %346
    %v349 = vmul.f32 %v342, %v347
    %351 = vrot.lane.b32.xlu0 %v349, 32
    %v352 = vpop.permute.xlu0 %351
    %v354 = vadd.f32 %v344, %v352
    %v355 = vtanh.pop %v354
    %357 = vrot.lane.b32.xlu0 %v355, 64
    %v358 = vpop.permute.xlu0 %357
    %v360 = vmul.f32 %v342, %v358
    %v361 = vsel %vm153, %v254, 0
    %363 = vmatprep.subr.mxu0 0.0
    %364 = vmatpush1.msra.mxu0 %v44
    %365 = vmatprep.subr.mxu0 0.0
    %366 = vmatpush1.msra.mxu0 %v45
    %367 = vmatprep.subr.mxu0 0.0
    %368 = vmatpush1.msra.mxu0 %v46
    %369 = vmatprep.subr.mxu0 0.0
    %370 = vmatpush1.msra.mxu0 %v47
    %371 = vmatprep.subr.mxu0 0.0
    %372 = vmatpush1.msra.mxu0 0.0
    %373 = vmatprep.subr.mxu0 0.0
    %374 = vmatpush1.msra.mxu0 0.0
    %375 = vmatprep.subr.mxu0 0.0
    %376 = vmatpush1.msra.mxu0 0.0
    %377 = vmatprep.subr.mxu0 0.0
    %378 = vmatpush1.msra.mxu0 0.0
    %379 = vmatprep.subr.mxu0 0.0
    %380 = vmatpush1.msra.mxu0 0.0
    %381 = vmatprep.subr.mxu0 0.0
    %382 = vmatpush1.msra.mxu0 0.0
    %383 = vmatprep.subr.mxu0 0.0
    %384 = vmatpush1.msra.mxu0 0.0
    %385 = vmatprep.subr.mxu0 0.0
    %386 = vmatpush1.msra.mxu0 0.0
    %387 = vmatprep.subr.mxu0 0.0
    %388 = vmatpush1.msra.mxu0 0.0
    %389 = vmatprep.subr.mxu0 0.0
    %390 = vmatpush1.msra.mxu0 0.0
    %391 = vmatprep.subr.mxu0 0.0
    %392 = vmatpush1.msra.mxu0 0.0
    %393 = vmatprep.subr.mxu0 0.0
    %394 = vmatpush1.msra.mxu0 0.0
    %395 = vmatprep.subr.mxu0 0.0
    %396 = vmatpush1.msra.mxu0 0.0
    %397 = vmatprep.subr.mxu0 0.0
    %398 = vmatpush1.msra.mxu0 0.0
    %399 = vmatprep.subr.mxu0 0.0
    %400 = vmatpush1.msra.mxu0 0.0
    %401 = vmatprep.subr.mxu0 0.0
    %402 = vmatpush1.msra.mxu0 0.0
    %403 = vmatprep.subr.mxu0 0.0
    %404 = vmatpush1.msra.mxu0 0.0
    %405 = vmatprep.subr.mxu0 0.0
    %406 = vmatpush1.msra.mxu0 0.0
    %407 = vmatprep.subr.mxu0 0.0
    %408 = vmatpush1.msra.mxu0 0.0
    %409 = vmatprep.subr.mxu0 0.0
    %410 = vmatpush1.msra.mxu0 0.0
    %411 = vmatprep.subr.mxu0 0.0
    %412 = vmatpush1.msra.mxu0 0.0
    %413 = vmatprep.subr.mxu0 0.0
    %414 = vmatpush1.msra.mxu0 0.0
    %415 = vmatprep.subr.mxu0 0.0
    %416 = vmatpush1.msra.mxu0 0.0
    %417 = vmatprep.subr.mxu0 0.0
    %418 = vmatpush1.msra.mxu0 0.0
    %419 = vmatprep.subr.mxu0 0.0
    %420 = vmatpush1.msra.mxu0 0.0
    %421 = vmatprep.subr.mxu0 0.0
    %422 = vmatpush1.msra.mxu0 0.0
    %423 = vmatprep.subr.mxu0 0.0
    %424 = vmatpush1.msra.mxu0 0.0
    %425 = vmatprep.subr.mxu0 0.0
    %426 = vmatpush1.msra.mxu0 0.0
    %427 = vmatprep.mubr.f32.mxu0 0.0
    %428 = vmatmul.mubr.f32.gmra.mrb[0].mxu0 %v361
    %v429 = vpop.f32.mrb[0].mxu0
    %v430 = vadd.f32 0.0, %v429
    %v431 = vpop.f32.mrb[0].mxu0
    %432 = vdwg.mxu0
    %v434 = vrot.slane %v430, 6
    %v436 = vadd.f32 %v145, %v434
    %v437 = vxor.u32 %v436, 2147483648
    %v438 = vmul.f32 %v437, 1.442695
    %v439 = vpow.pop %v438
    %v440 = vadd.f32 %v439, 1.0
    %v441 = vrcp.pop %v440
    %v442 = vmul.f32 1.0, %v441
    %v443 = vtanh.pop %v436
    %v445 = vrot.slane %v245, 6
    %v447 = vmul.f32 %v442, %v445
    %449 = vrot.lane.b32.xlu0 %v443, 64
    %v450 = vpop.permute.xlu0 %449
    %v452 = vmul.f32 %v442, %v450
    %454 = vrot.lane.b32.xlu0 %v452, 32
    %v455 = vpop.permute.xlu0 %454
    %v457 = vadd.f32 %v447, %v455
    %v458 = vtanh.pop %v457
    %460 = vrot.lane.b32.xlu0 %v458, 64
    %v461 = vpop.permute.xlu0 %460
    %v463 = vmul.f32 %v442, %v461
    %465 = vrot.lane.b32.xlu0 %v463, 32
    %v466 = vpop.permute.xlu0 %465
    %v469 = vrot.slane %v360, 6
    %470 = vrot.lane.b32.xlu0 %v469, 64
    %v471 = vpop.permute.xlu0 %470
    %v473 = vsel %vm153, %v466, %v471
    %v475 = vrot.slane %v473, 2
    %v476 = vsel %vm263, %v475, 0
    %478 = vmatprep.subr.mxu0 0.0
    %479 = vmatpush1.msra.mxu0 %v48
    %480 = vmatprep.subr.mxu0 0.0
    %481 = vmatpush1.msra.mxu0 %v49
    %482 = vmatprep.subr.mxu0 0.0
    %483 = vmatpush1.msra.mxu0 %v50
    %484 = vmatprep.subr.mxu0 0.0
    %485 = vmatpush1.msra.mxu0 %v51
    %486 = vmatprep.subr.mxu0 0.0
    %487 = vmatpush1.msra.mxu0 %v52
    %488 = vmatprep.subr.mxu0 0.0
    %489 = vmatpush1.msra.mxu0 %v53
    %490 = vmatprep.subr.mxu0 0.0
    %491 = vmatpush1.msra.mxu0 %v54
    %492 = vmatprep.subr.mxu0 0.0
    %493 = vmatpush1.msra.mxu0 %v55
    %494 = vmatprep.subr.mxu0 0.0
    %495 = vmatpush1.msra.mxu0 0.0
    %496 = vmatprep.subr.mxu0 0.0
    %497 = vmatpush1.msra.mxu0 0.0
    %498 = vmatprep.subr.mxu0 0.0
    %499 = vmatpush1.msra.mxu0 0.0
    %500 = vmatprep.subr.mxu0 0.0
    %501 = vmatpush1.msra.mxu0 0.0
    %502 = vmatprep.subr.mxu0 0.0
    %503 = vmatpush1.msra.mxu0 0.0
    %504 = vmatprep.subr.mxu0 0.0
    %505 = vmatpush1.msra.mxu0 0.0
    %506 = vmatprep.subr.mxu0 0.0
    %507 = vmatpush1.msra.mxu0 0.0
    %508 = vmatprep.subr.mxu0 0.0
    %509 = vmatpush1.msra.mxu0 0.0
    %510 = vmatprep.subr.mxu0 0.0
    %511 = vmatpush1.msra.mxu0 0.0
    %512 = vmatprep.subr.mxu0 0.0
    %513 = vmatpush1.msra.mxu0 0.0
    %514 = vmatprep.subr.mxu0 0.0
    %515 = vmatpush1.msra.mxu0 0.0
    %516 = vmatprep.subr.mxu0 0.0
    %517 = vmatpush1.msra.mxu0 0.0
    %518 = vmatprep.subr.mxu0 0.0
    %519 = vmatpush1.msra.mxu0 0.0
    %520 = vmatprep.subr.mxu0 0.0
    %521 = vmatpush1.msra.mxu0 0.0
    %522 = vmatprep.subr.mxu0 0.0
    %523 = vmatpush1.msra.mxu0 0.0
    %524 = vmatprep.subr.mxu0 0.0
    %525 = vmatpush1.msra.mxu0 0.0
    %526 = vmatprep.subr.mxu0 0.0
    %527 = vmatpush1.msra.mxu0 0.0
    %528 = vmatprep.subr.mxu0 0.0
    %529 = vmatpush1.msra.mxu0 0.0
    %530 = vmatprep.subr.mxu0 0.0
    %531 = vmatpush1.msra.mxu0 0.0
    %532 = vmatprep.subr.mxu0 0.0
    %533 = vmatpush1.msra.mxu0 0.0
    %534 = vmatprep.subr.mxu0 0.0
    %535 = vmatpush1.msra.mxu0 0.0
    %536 = vmatprep.subr.mxu0 0.0
    %537 = vmatpush1.msra.mxu0 0.0
    %538 = vmatprep.subr.mxu0 0.0
    %539 = vmatpush1.msra.mxu0 0.0
    %540 = vmatprep.subr.mxu0 0.0
    %541 = vmatpush1.msra.mxu0 0.0
    %542 = vmatprep.mubr.f32.mxu0 0.0
    %543 = vmatmul.mubr.f32.gmra.mrb[0].mxu0 %v476
    %v544 = vpop.f32.mrb[0].mxu0
    %v545 = vadd.f32 %v261, %v544
    %v546 = vpop.f32.mrb[0].mxu0
    %547 = vdwg.mxu0
    %v548 = vxor.u32 %v545, 2147483648
    %v549 = vmul.f32 %v548, 1.442695
    %v550 = vpow.pop %v549
    %v551 = vadd.f32 %v550, 1.0
    %v552 = vrcp.pop %v551
    %v553 = vmul.f32 1.0, %v552
    %v554 = vtanh.pop %v545
    %v555 = vmul.f32 %v553, %v354
    %557 = vrot.lane.b32.xlu0 %v554, 64
    %v558 = vpop.permute.xlu0 %557
    %v560 = vmul.f32 %v553, %v558
    %562 = vrot.lane.b32.xlu0 %v560, 32
    %v563 = vpop.permute.xlu0 %562
    %v565 = vadd.f32 %v555, %v563
    %v566 = vtanh.pop %v565
    %568 = vrot.lane.b32.xlu0 %v566, 64
    %v569 = vpop.permute.xlu0 %568
    %v571 = vmul.f32 %v553, %v569
    %v572 = vrot.slane %v463, 2
    %573 = vrot.lane.b32.xlu0 %v572, 32
    %v574 = vpop.permute.xlu0 %573
    %v575 = vsel %vm153, %v574, 0
    %577 = vmatprep.subr.mxu0 0.0
    %578 = vmatpush1.msra.mxu0 %v44
    %579 = vmatprep.subr.mxu0 0.0
    %580 = vmatpush1.msra.mxu0 %v45
    %581 = vmatprep.subr.mxu0 0.0
    %582 = vmatpush1.msra.mxu0 %v46
    %583 = vmatprep.subr.mxu0 0.0
    %584 = vmatpush1.msra.mxu0 %v47
    %585 = vmatprep.subr.mxu0 0.0
    %586 = vmatpush1.msra.mxu0 0.0
    %587 = vmatprep.subr.mxu0 0.0
    %588 = vmatpush1.msra.mxu0 0.0
    %589 = vmatprep.subr.mxu0 0.0
    %590 = vmatpush1.msra.mxu0 0.0
    %591 = vmatprep.subr.mxu0 0.0
    %592 = vmatpush1.msra.mxu0 0.0
    %593 = vmatprep.subr.mxu0 0.0
    %594 = vmatpush1.msra.mxu0 0.0
    %595 = vmatprep.subr.mxu0 0.0
    %596 = vmatpush1.msra.mxu0 0.0
    %597 = vmatprep.subr.mxu0 0.0
    %598 = vmatpush1.msra.mxu0 0.0
    %599 = vmatprep.subr.mxu0 0.0
    %600 = vmatpush1.msra.mxu0 0.0
    %601 = vmatprep.subr.mxu0 0.0
    %602 = vmatpush1.msra.mxu0 0.0
    %603 = vmatprep.subr.mxu0 0.0
    %604 = vmatpush1.msra.mxu0 0.0
    %605 = vmatprep.subr.mxu0 0.0
    %606 = vmatpush1.msra.mxu0 0.0
    %607 = vmatprep.subr.mxu0 0.0
    %608 = vmatpush1.msra.mxu0 0.0
    %609 = vmatprep.subr.mxu0 0.0
    %610 = vmatpush1.msra.mxu0 0.0
    %611 = vmatprep.subr.mxu0 0.0
    %612 = vmatpush1.msra.mxu0 0.0
    %613 = vmatprep.subr.mxu0 0.0
    %614 = vmatpush1.msra.mxu0 0.0
    %615 = vmatprep.subr.mxu0 0.0
    %616 = vmatpush1.msra.mxu0 0.0
    %617 = vmatprep.subr.mxu0 0.0
    %618 = vmatpush1.msra.mxu0 0.0
    %619 = vmatprep.subr.mxu0 0.0
    %620 = vmatpush1.msra.mxu0 0.0
    %621 = vmatprep.subr.mxu0 0.0
    %622 = vmatpush1.msra.mxu0 0.0
    %623 = vmatprep.subr.mxu0 0.0
    %624 = vmatpush1.msra.mxu0 0.0
    %625 = vmatprep.subr.mxu0 0.0
    %626 = vmatpush1.msra.mxu0 0.0
    %627 = vmatprep.subr.mxu0 0.0
    %628 = vmatpush1.msra.mxu0 0.0
    %629 = vmatprep.subr.mxu0 0.0
    %630 = vmatpush1.msra.mxu0 0.0
    %631 = vmatprep.subr.mxu0 0.0
    %632 = vmatpush1.msra.mxu0 0.0
    %633 = vmatprep.subr.mxu0 0.0
    %634 = vmatpush1.msra.mxu0 0.0
    %635 = vmatprep.subr.mxu0 0.0
    %636 = vmatpush1.msra.mxu0 0.0
    %637 = vmatprep.subr.mxu0 0.0
    %638 = vmatpush1.msra.mxu0 0.0
    %639 = vmatprep.subr.mxu0 0.0
    %640 = vmatpush1.msra.mxu0 0.0
    %641 = vmatprep.mubr.f32.mxu0 0.0
    %642 = vmatmul.mubr.f32.gmra.mrb[0].mxu0 %v575
    %v643 = vpop.f32.mrb[0].mxu0
    %v644 = vadd.f32 0.0, %v643
    %v645 = vpop.f32.mrb[0].mxu0
    %646 = vdwg.mxu0
    %v648 = vrot.slane %v644, 4
    %v650 = vadd.f32 %v145, %v648
    %v651 = vxor.u32 %v650, 2147483648
    %v652 = vmul.f32 %v651, 1.442695
    %v653 = vpow.pop %v652
    %v654 = vadd.f32 %v653, 1.0
    %v655 = vrcp.pop %v654
    %v656 = vmul.f32 1.0, %v655
    %v657 = vtanh.pop %v650
    %v659 = vrot.slane %v457, 6
    %v661 = vmul.f32 %v656, %v659
    %663 = vrot.lane.b32.xlu0 %v657, 64
    %v664 = vpop.permute.xlu0 %663
    %v666 = vmul.f32 %v656, %v664
    %668 = vrot.lane.b32.xlu0 %v666, 32
    %v669 = vpop.permute.xlu0 %668
    %v671 = vadd.f32 %v661, %v669
    %v672 = vtanh.pop %v671
    %674 = vrot.lane.b32.xlu0 %v672, 64
    %v675 = vpop.permute.xlu0 %674
    %v677 = vmul.f32 %v656, %v675
    %679 = vrot.lane.b32.xlu0 %v677, 32
    %v680 = vpop.permute.xlu0 %679
    %v683 = vrot.slane %v571, 4
    %684 = vrot.lane.b32.xlu0 %v683, 64
    %v685 = vpop.permute.xlu0 %684
    %v687 = vsel %vm153, %v680, %v685
    %v689 = vrot.slane %v687, 4
    %v690 = vsel %vm263, %v689, 0
    %692 = vmatprep.subr.mxu0 0.0
    %693 = vmatpush1.msra.mxu0 %v48
    %694 = vmatprep.subr.mxu0 0.0
    %695 = vmatpush1.msra.mxu0 %v49
    %696 = vmatprep.subr.mxu0 0.0
    %697 = vmatpush1.msra.mxu0 %v50
    %698 = vmatprep.subr.mxu0 0.0
    %699 = vmatpush1.msra.mxu0 %v51
    %700 = vmatprep.subr.mxu0 0.0
    %701 = vmatpush1.msra.mxu0 %v52
    %702 = vmatprep.subr.mxu0 0.0
    %703 = vmatpush1.msra.mxu0 %v53
    %704 = vmatprep.subr.mxu0 0.0
    %705 = vmatpush1.msra.mxu0 %v54
    %706 = vmatprep.subr.mxu0 0.0
    %707 = vmatpush1.msra.mxu0 %v55
    %708 = vmatprep.subr.mxu0 0.0
    %709 = vmatpush1.msra.mxu0 0.0
    %710 = vmatprep.subr.mxu0 0.0
    %711 = vmatpush1.msra.mxu0 0.0
    %712 = vmatprep.subr.mxu0 0.0
    %713 = vmatpush1.msra.mxu0 0.0
    %714 = vmatprep.subr.mxu0 0.0
    %715 = vmatpush1.msra.mxu0 0.0
    %716 = vmatprep.subr.mxu0 0.0
    %717 = vmatpush1.msra.mxu0 0.0
    %718 = vmatprep.subr.mxu0 0.0
    %719 = vmatpush1.msra.mxu0 0.0
    %720 = vmatprep.subr.mxu0 0.0
    %721 = vmatpush1.msra.mxu0 0.0
    %722 = vmatprep.subr.mxu0 0.0
    %723 = vmatpush1.msra.mxu0 0.0
    %724 = vmatprep.subr.mxu0 0.0
    %725 = vmatpush1.msra.mxu0 0.0
    %726 = vmatprep.subr.mxu0 0.0
    %727 = vmatpush1.msra.mxu0 0.0
    %728 = vmatprep.subr.mxu0 0.0
    %729 = vmatpush1.msra.mxu0 0.0
    %730 = vmatprep.subr.mxu0 0.0
    %731 = vmatpush1.msra.mxu0 0.0
    %732 = vmatprep.subr.mxu0 0.0
    %733 = vmatpush1.msra.mxu0 0.0
    %734 = vmatprep.subr.mxu0 0.0
    %735 = vmatpush1.msra.mxu0 0.0
    %736 = vmatprep.subr.mxu0 0.0
    %737 = vmatpush1.msra.mxu0 0.0
    %738 = vmatprep.subr.mxu0 0.0
    %739 = vmatpush1.msra.mxu0 0.0
    %740 = vmatprep.subr.mxu0 0.0
    %741 = vmatpush1.msra.mxu0 0.0
    %742 = vmatprep.subr.mxu0 0.0
    %743 = vmatpush1.msra.mxu0 0.0
    %744 = vmatprep.subr.mxu0 0.0
    %745 = vmatpush1.msra.mxu0 0.0
    %746 = vmatprep.subr.mxu0 0.0
    %747 = vmatpush1.msra.mxu0 0.0
    %748 = vmatprep.subr.mxu0 0.0
    %749 = vmatpush1.msra.mxu0 0.0
    %750 = vmatprep.subr.mxu0 0.0
    %751 = vmatpush1.msra.mxu0 0.0
    %752 = vmatprep.subr.mxu0 0.0
    %753 = vmatpush1.msra.mxu0 0.0
    %754 = vmatprep.subr.mxu0 0.0
    %755 = vmatpush1.msra.mxu0 0.0
    %756 = vmatprep.mubr.f32.mxu0 0.0
    %757 = vmatmul.mubr.f32.gmra.mrb[0].mxu0 %v690
    %v758 = vpop.f32.mrb[0].mxu0
    %v759 = vadd.f32 %v261, %v758
    %v760 = vpop.f32.mrb[0].mxu0
    %761 = vdwg.mxu0
    %v762 = vxor.u32 %v759, 2147483648
    %v763 = vmul.f32 %v762, 1.442695
    %v764 = vpow.pop %v763
    %v765 = vadd.f32 %v764, 1.0
    %v766 = vrcp.pop %v765
    %v767 = vmul.f32 1.0, %v766
    %v768 = vtanh.pop %v759
    %v769 = vmul.f32 %v767, %v565
    %771 = vrot.lane.b32.xlu0 %v768, 64
    %v772 = vpop.permute.xlu0 %771
    %v774 = vmul.f32 %v767, %v772
    %776 = vrot.lane.b32.xlu0 %v774, 32
    %v777 = vpop.permute.xlu0 %776
    %v779 = vadd.f32 %v769, %v777
    %v780 = vtanh.pop %v779
    %782 = vrot.lane.b32.xlu0 %v780, 64
    %v783 = vpop.permute.xlu0 %782
    %v785 = vmul.f32 %v767, %v783
    %v786 = vrot.slane %v677, 4
    %787 = vrot.lane.b32.xlu0 %v786, 32
    %v788 = vpop.permute.xlu0 %787
    %v789 = vsel %vm153, %v788, 0
    %791 = vmatprep.subr.mxu0 0.0
    %792 = vmatpush1.msra.mxu0 %v44
    %793 = vmatprep.subr.mxu0 0.0
    %794 = vmatpush1.msra.mxu0 %v45
    %795 = vmatprep.subr.mxu0 0.0
    %796 = vmatpush1.msra.mxu0 %v46
    %797 = vmatprep.subr.mxu0 0.0
    %798 = vmatpush1.msra.mxu0 %v47
    %799 = vmatprep.subr.mxu0 0.0
    %800 = vmatpush1.msra.mxu0 0.0
    %801 = vmatprep.subr.mxu0 0.0
    %802 = vmatpush1.msra.mxu0 0.0
    %803 = vmatprep.subr.mxu0 0.0
    %804 = vmatpush1.msra.mxu0 0.0
    %805 = vmatprep.subr.mxu0 0.0
    %806 = vmatpush1.msra.mxu0 0.0
    %807 = vmatprep.subr.mxu0 0.0
    %808 = vmatpush1.msra.mxu0 0.0
    %809 = vmatprep.subr.mxu0 0.0
    %810 = vmatpush1.msra.mxu0 0.0
    %811 = vmatprep.subr.mxu0 0.0
    %812 = vmatpush1.msra.mxu0 0.0
    %813 = vmatprep.subr.mxu0 0.0
    %814 = vmatpush1.msra.mxu0 0.0
    %815 = vmatprep.subr.mxu0 0.0
    %816 = vmatpush1.msra.mxu0 0.0
    %817 = vmatprep.subr.mxu0 0.0
    %818 = vmatpush1.msra.mxu0 0.0
    %819 = vmatprep.subr.mxu0 0.0
    %820 = vmatpush1.msra.mxu0 0.0
    %821 = vmatprep.subr.mxu0 0.0
    %822 = vmatpush1.msra.mxu0 0.0
    %823 = vmatprep.subr.mxu0 0.0
    %824 = vmatpush1.msra.mxu0 0.0
    %825 = vmatprep.subr.mxu0 0.0
    %826 = vmatpush1.msra.mxu0 0.0
    %827 = vmatprep.subr.mxu0 0.0
    %828 = vmatpush1.msra.mxu0 0.0
    %829 = vmatprep.subr.mxu0 0.0
    %830 = vmatpush1.msra.mxu0 0.0
    %831 = vmatprep.subr.mxu0 0.0
    %832 = vmatpush1.msra.mxu0 0.0
    %833 = vmatprep.subr.mxu0 0.0
    %834 = vmatpush1.msra.mxu0 0.0
    %835 = vmatprep.subr.mxu0 0.0
    %836 = vmatpush1.msra.mxu0 0.0
    %837 = vmatprep.subr.mxu0 0.0
    %838 = vmatpush1.msra.mxu0 0.0
    %839 = vmatprep.subr.mxu0 0.0
    %840 = vmatpush1.msra.mxu0 0.0
    %841 = vmatprep.subr.mxu0 0.0
    %842 = vmatpush1.msra.mxu0 0.0
    %843 = vmatprep.subr.mxu0 0.0
    %844 = vmatpush1.msra.mxu0 0.0
    %845 = vmatprep.subr.mxu0 0.0
    %846 = vmatpush1.msra.mxu0 0.0
    %847 = vmatprep.subr.mxu0 0.0
    %848 = vmatpush1.msra.mxu0 0.0
    %849 = vmatprep.subr.mxu0 0.0
    %850 = vmatpush1.msra.mxu0 0.0
    %851 = vmatprep.subr.mxu0 0.0
    %852 = vmatpush1.msra.mxu0 0.0
    %853 = vmatprep.subr.mxu0 0.0
    %854 = vmatpush1.msra.mxu0 0.0
    %855 = vmatprep.mubr.f32.mxu0 0.0
    %856 = vmatmul.mubr.f32.gmra.mrb[0].mxu0 %v789
    %v857 = vpop.f32.mrb[0].mxu0
    %v858 = vadd.f32 0.0, %v857
    %v859 = vpop.f32.mrb[0].mxu0
    %860 = vdwg.mxu0
    %v862 = vrot.slane %v858, 2
    %v864 = vadd.f32 %v145, %v862
    %v865 = vxor.u32 %v864, 2147483648
    %v866 = vmul.f32 %v865, 1.442695
    %v867 = vpow.pop %v866
    %v868 = vadd.f32 %v867, 1.0
    %v869 = vrcp.pop %v868
    %v870 = vmul.f32 1.0, %v869
    %v871 = vtanh.pop %v864
    %v873 = vrot.slane %v671, 6
    %v875 = vmul.f32 %v870, %v873
    %877 = vrot.lane.b32.xlu0 %v871, 64
    %v878 = vpop.permute.xlu0 %877
    %v880 = vmul.f32 %v870, %v878
    %882 = vrot.lane.b32.xlu0 %v880, 32
    %v883 = vpop.permute.xlu0 %882
    %v885 = vadd.f32 %v875, %v883
    %v886 = vtanh.pop %v885
    %888 = vrot.lane.b32.xlu0 %v886, 64
    %v889 = vpop.permute.xlu0 %888
    %v891 = vmul.f32 %v870, %v889
    %893 = vrot.lane.b32.xlu0 %v891, 32
    %v894 = vpop.permute.xlu0 %893
    %v897 = vrot.slane %v785, 2
    %898 = vrot.lane.b32.xlu0 %v897, 64
    %v899 = vpop.permute.xlu0 %898
    %v901 = vsel %vm153, %v894, %v899
    %v903 = vrot.slane %v901, 6
    %v904 = vsel %vm263, %v903, 0
    %906 = vmatprep.subr.mxu0 0.0
    %907 = vmatpush1.msra.mxu0 %v48
    %908 = vmatprep.subr.mxu0 0.0
    %909 = vmatpush1.msra.mxu0 %v49
    %910 = vmatprep.subr.mxu0 0.0
    %911 = vmatpush1.msra.mxu0 %v50
    %912 = vmatprep.subr.mxu0 0.0
    %913 = vmatpush1.msra.mxu0 %v51
    %914 = vmatprep.subr.mxu0 0.0
    %915 = vmatpush1.msra.mxu0 %v52
    %916 = vmatprep.subr.mxu0 0.0
    %917 = vmatpush1.msra.mxu0 %v53
    %918 = vmatprep.subr.mxu0 0.0
    %919 = vmatpush1.msra.mxu0 %v54
    %920 = vmatprep.subr.mxu0 0.0
    %921 = vmatpush1.msra.mxu0 %v55
    %922 = vmatprep.subr.mxu0 0.0
    %923 = vmatpush1.msra.mxu0 0.0
    %924 = vmatprep.subr.mxu0 0.0
    %925 = vmatpush1.msra.mxu0 0.0
    %926 = vmatprep.subr.mxu0 0.0
    %927 = vmatpush1.msra.mxu0 0.0
    %928 = vmatprep.subr.mxu0 0.0
    %929 = vmatpush1.msra.mxu0 0.0
    %930 = vmatprep.subr.mxu0 0.0
    %931 = vmatpush1.msra.mxu0 0.0
    %932 = vmatprep.subr.mxu0 0.0
    %933 = vmatpush1.msra.mxu0 0.0
    %934 = vmatprep.subr.mxu0 0.0
    %935 = vmatpush1.msra.mxu0 0.0
    %936 = vmatprep.subr.mxu0 0.0
    %937 = vmatpush1.msra.mxu0 0.0
    %938 = vmatprep.subr.mxu0 0.0
    %939 = vmatpush1.msra.mxu0 0.0
    %940 = vmatprep.subr.mxu0 0.0
    %941 = vmatpush1.msra.mxu0 0.0
    %942 = vmatprep.subr.mxu0 0.0
    %943 = vmatpush1.msra.mxu0 0.0
    %944 = vmatprep.subr.mxu0 0.0
    %945 = vmatpush1.msra.mxu0 0.0
    %946 = vmatprep.subr.mxu0 0.0
    %947 = vmatpush1.msra.mxu0 0.0
    %948 = vmatprep.subr.mxu0 0.0
    %949 = vmatpush1.msra.mxu0 0.0
    %950 = vmatprep.subr.mxu0 0.0
    %951 = vmatpush1.msra.mxu0 0.0
    %952 = vmatprep.subr.mxu0 0.0
    %953 = vmatpush1.msra.mxu0 0.0
    %954 = vmatprep.subr.mxu0 0.0
    %955 = vmatpush1.msra.mxu0 0.0
    %956 = vmatprep.subr.mxu0 0.0
    %957 = vmatpush1.msra.mxu0 0.0
    %958 = vmatprep.subr.mxu0 0.0
    %959 = vmatpush1.msra.mxu0 0.0
    %960 = vmatprep.subr.mxu0 0.0
    %961 = vmatpush1.msra.mxu0 0.0
    %962 = vmatprep.subr.mxu0 0.0
    %963 = vmatpush1.msra.mxu0 0.0
    %964 = vmatprep.subr.mxu0 0.0
    %965 = vmatpush1.msra.mxu0 0.0
    %966 = vmatprep.subr.mxu0 0.0
    %967 = vmatpush1.msra.mxu0 0.0
    %968 = vmatprep.subr.mxu0 0.0
    %969 = vmatpush1.msra.mxu0 0.0
    %970 = vmatprep.mubr.f32.mxu0 0.0
    %971 = vmatmul.mubr.f32.gmra.mrb[0].mxu0 %v904
    %v972 = vpop.f32.mrb[0].mxu0
    %v973 = vadd.f32 %v261, %v972
    %v974 = vpop.f32.mrb[0].mxu0
    %975 = vdwg.mxu0
    %v976 = vxor.u32 %v973, 2147483648
    %v977 = vmul.f32 %v976, 1.442695
    %v978 = vpow.pop %v977
    %v979 = vadd.f32 %v978, 1.0
    %v980 = vrcp.pop %v979
    %v981 = vmul.f32 1.0, %v980
    %v982 = vtanh.pop %v973
    %v983 = vmul.f32 %v981, %v779
    %985 = vrot.lane.b32.xlu0 %v982, 64
    %v986 = vpop.permute.xlu0 %985
    %v988 = vmul.f32 %v981, %v986
    %990 = vrot.lane.b32.xlu0 %v988, 32
    %v991 = vpop.permute.xlu0 %990
    %v993 = vadd.f32 %v983, %v991
    %v994 = vtanh.pop %v993
    %996 = vrot.lane.b32.xlu0 %v994, 64
    %v997 = vpop.permute.xlu0 %996
    %v999 = vmul.f32 %v981, %v997
    %v1000 = vrot.slane %v891, 6
    %1001 = vrot.lane.b32.xlu0 %v1000, 32
    %v1002 = vpop.permute.xlu0 %1001
    %v1003 = vsel %vm153, %v1002, 0
    %1005 = vmatprep.subr.mxu0 0.0
    %1006 = vmatpush1.msra.mxu0 %v44
    %1007 = vmatprep.subr.mxu0 0.0
    %1008 = vmatpush1.msra.mxu0 %v45
    %1009 = vmatprep.subr.mxu0 0.0
    %1010 = vmatpush1.msra.mxu0 %v46
    %1011 = vmatprep.subr.mxu0 0.0
    %1012 = vmatpush1.msra.mxu0 %v47
    %1013 = vmatprep.subr.mxu0 0.0
    %1014 = vmatpush1.msra.mxu0 0.0
    %1015 = vmatprep.subr.mxu0 0.0
    %1016 = vmatpush1.msra.mxu0 0.0
    %1017 = vmatprep.subr.mxu0 0.0
    %1018 = vmatpush1.msra.mxu0 0.0
    %1019 = vmatprep.subr.mxu0 0.0
    %1020 = vmatpush1.msra.mxu0 0.0
    %1021 = vmatprep.subr.mxu0 0.0
    %1022 = vmatpush1.msra.mxu0 0.0
    %1023 = vmatprep.subr.mxu0 0.0
    %1024 = vmatpush1.msra.mxu0 0.0
    %1025 = vmatprep.subr.mxu0 0.0
    %1026 = vmatpush1.msra.mxu0 0.0
    %1027 = vmatprep.subr.mxu0 0.0
    %1028 = vmatpush1.msra.mxu0 0.0
    %1029 = vmatprep.subr.mxu0 0.0
    %1030 = vmatpush1.msra.mxu0 0.0
    %1031 = vmatprep.subr.mxu0 0.0
    %1032 = vmatpush1.msra.mxu0 0.0
    %1033 = vmatprep.subr.mxu0 0.0
    %1034 = vmatpush1.msra.mxu0 0.0
    %1035 = vmatprep.subr.mxu0 0.0
    %1036 = vmatpush1.msra.mxu0 0.0
    %1037 = vmatprep.subr.mxu0 0.0
    %1038 = vmatpush1.msra.mxu0 0.0
    %1039 = vmatprep.subr.mxu0 0.0
    %1040 = vmatpush1.msra.mxu0 0.0
    %1041 = vmatprep.subr.mxu0 0.0
    %1042 = vmatpush1.msra.mxu0 0.0
    %1043 = vmatprep.subr.mxu0 0.0
    %1044 = vmatpush1.msra.mxu0 0.0
    %1045 = vmatprep.subr.mxu0 0.0
    %1046 = vmatpush1.msra.mxu0 0.0
    %1047 = vmatprep.subr.mxu0 0.0
    %1048 = vmatpush1.msra.mxu0 0.0
    %1049 = vmatprep.subr.mxu0 0.0
    %1050 = vmatpush1.msra.mxu0 0.0
    %1051 = vmatprep.subr.mxu0 0.0
    %1052 = vmatpush1.msra.mxu0 0.0
    %1053 = vmatprep.subr.mxu0 0.0
    %1054 = vmatpush1.msra.mxu0 0.0
    %1055 = vmatprep.subr.mxu0 0.0
    %1056 = vmatpush1.msra.mxu0 0.0
    %1057 = vmatprep.subr.mxu0 0.0
    %1058 = vmatpush1.msra.mxu0 0.0
    %1059 = vmatprep.subr.mxu0 0.0
    %1060 = vmatpush1.msra.mxu0 0.0
    %1061 = vmatprep.subr.mxu0 0.0
    %1062 = vmatpush1.msra.mxu0 0.0
    %1063 = vmatprep.subr.mxu0 0.0
    %1064 = vmatpush1.msra.mxu0 0.0
    %1065 = vmatprep.subr.mxu0 0.0
    %1066 = vmatpush1.msra.mxu0 0.0
    %1067 = vmatprep.subr.mxu0 0.0
    %1068 = vmatpush1.msra.mxu0 0.0
    %1069 = vmatprep.mubr.f32.mxu0 0.0
    %1070 = vmatmul.mubr.f32.gmra.mrb[0].mxu0 %v1003
    %v1071 = vpop.f32.mrb[0].mxu0
    %v1072 = vadd.f32 0.0, %v1071
    %v1073 = vpop.f32.mrb[0].mxu0
    %1074 = vdwg.mxu0
    %v1075 = vadd.f32 %v150, %v1072
    %v1076 = vxor.u32 %v1075, 2147483648
    %v1077 = vmul.f32 %v1076, 1.442695
    %v1078 = vpow.pop %v1077
    %v1079 = vadd.f32 %v1078, 1.0
    %v1080 = vrcp.pop %v1079
    %v1081 = vmul.f32 1.0, %v1080
    %v1082 = vtanh.pop %v1075
    %v1084 = vrot.slane %v885, 6
    %v1086 = vmul.f32 %v1081, %v1084
    %1088 = vrot.lane.b32.xlu0 %v1082, 64
    %v1089 = vpop.permute.xlu0 %1088
    %v1091 = vmul.f32 %v1081, %v1089
    %1093 = vrot.lane.b32.xlu0 %v1091, 32
    %v1094 = vpop.permute.xlu0 %1093
    %v1096 = vadd.f32 %v1086, %v1094
    %v1097 = vtanh.pop %v1096
    %1099 = vrot.lane.b32.xlu0 %v1097, 64
    %v1100 = vpop.permute.xlu0 %1099
    %v1102 = vmul.f32 %v1081, %v1100
    %1104 = vrot.lane.b32.xlu0 %v1102, 32
    %v1105 = vpop.permute.xlu0 %1104
    %1108 = vrot.lane.b32.xlu0 %v999, 64
    %v1109 = vpop.permute.xlu0 %1108
    %v1111 = vsel %vm153, %v1105, %v1109
    %v1113 = vsel %vm263, %v1111, 0
    %1115 = vmatprep.subr.mxu0 0.0
    %1116 = vmatpush1.msra.mxu0 %v48
    %1117 = vmatprep.subr.mxu0 0.0
    %1118 = vmatpush1.msra.mxu0 %v49
    %1119 = vmatprep.subr.mxu0 0.0
    %1120 = vmatpush1.msra.mxu0 %v50
    %1121 = vmatprep.subr.mxu0 0.0
    %1122 = vmatpush1.msra.mxu0 %v51
    %1123 = vmatprep.subr.mxu0 0.0
    %1124 = vmatpush1.msra.mxu0 %v52
    %1125 = vmatprep.subr.mxu0 0.0
    %1126 = vmatpush1.msra.mxu0 %v53
    %1127 = vmatprep.subr.mxu0 0.0
    %1128 = vmatpush1.msra.mxu0 %v54
    %1129 = vmatprep.subr.mxu0 0.0
    %1130 = vmatpush1.msra.mxu0 %v55
    %1131 = vmatprep.subr.mxu0 0.0
    %1132 = vmatpush1.msra.mxu0 0.0
    %1133 = vmatprep.subr.mxu0 0.0
    %1134 = vmatpush1.msra.mxu0 0.0
    %1135 = vmatprep.subr.mxu0 0.0
    %1136 = vmatpush1.msra.mxu0 0.0
    %1137 = vmatprep.subr.mxu0 0.0
    %1138 = vmatpush1.msra.mxu0 0.0
    %1139 = vmatprep.subr.mxu0 0.0
    %1140 = vmatpush1.msra.mxu0 0.0
    %1141 = vmatprep.subr.mxu0 0.0
    %1142 = vmatpush1.msra.mxu0 0.0
    %1143 = vmatprep.subr.mxu0 0.0
    %1144 = vmatpush1.msra.mxu0 0.0
    %1145 = vmatprep.subr.mxu0 0.0
    %1146 = vmatpush1.msra.mxu0 0.0
    %1147 = vmatprep.subr.mxu0 0.0
    %1148 = vmatpush1.msra.mxu0 0.0
    %1149 = vmatprep.subr.mxu0 0.0
    %1150 = vmatpush1.msra.mxu0 0.0
    %1151 = vmatprep.subr.mxu0 0.0
    %1152 = vmatpush1.msra.mxu0 0.0
    %1153 = vmatprep.subr.mxu0 0.0
    %1154 = vmatpush1.msra.mxu0 0.0
    %1155 = vmatprep.subr.mxu0 0.0
    %1156 = vmatpush1.msra.mxu0 0.0
    %1157 = vmatprep.subr.mxu0 0.0
    %1158 = vmatpush1.msra.mxu0 0.0
    %1159 = vmatprep.subr.mxu0 0.0
    %1160 = vmatpush1.msra.mxu0 0.0
    %1161 = vmatprep.subr.mxu0 0.0
    %1162 = vmatpush1.msra.mxu0 0.0
    %1163 = vmatprep.subr.mxu0 0.0
    %1164 = vmatpush1.msra.mxu0 0.0
    %1165 = vmatprep.subr.mxu0 0.0
    %1166 = vmatpush1.msra.mxu0 0.0
    %1167 = vmatprep.subr.mxu0 0.0
    %1168 = vmatpush1.msra.mxu0 0.0
    %1169 = vmatprep.subr.mxu0 0.0
    %1170 = vmatpush1.msra.mxu0 0.0
    %1171 = vmatprep.subr.mxu0 0.0
    %1172 = vmatpush1.msra.mxu0 0.0
    %1173 = vmatprep.subr.mxu0 0.0
    %1174 = vmatpush1.msra.mxu0 0.0
    %1175 = vmatprep.subr.mxu0 0.0
    %1176 = vmatpush1.msra.mxu0 0.0
    %1177 = vmatprep.subr.mxu0 0.0
    %1178 = vmatpush1.msra.mxu0 0.0
    %1179 = vmatprep.mubr.f32.mxu0 0.0
    %1180 = vmatmul.mubr.f32.gmra.mrb[0].mxu0 %v1113
    %v1181 = vpop.f32.mrb[0].mxu0
    %v1182 = vadd.f32 %v261, %v1181
    %v1183 = vpop.f32.mrb[0].mxu0
    %1184 = vdwg.mxu0
    %v1185 = vxor.u32 %v1182, 2147483648
    %v1186 = vmul.f32 %v1185, 1.442695
    %v1187 = vpow.pop %v1186
    %v1188 = vadd.f32 %v1187, 1.0
    %v1189 = vrcp.pop %v1188
    %v1190 = vmul.f32 1.0, %v1189
    %v1191 = vtanh.pop %v1182
    %v1192 = vmul.f32 %v1190, %v993
    %1194 = vrot.lane.b32.xlu0 %v1191, 64
    %v1195 = vpop.permute.xlu0 %1194
    %v1197 = vmul.f32 %v1190, %v1195
    %1199 = vrot.lane.b32.xlu0 %v1197, 32
    %v1200 = vpop.permute.xlu0 %1199
    %v1202 = vadd.f32 %v1192, %v1200
    %v1203 = vtanh.pop %v1202
    %1205 = vrot.lane.b32.xlu0 %v1203, 64
    %v1206 = vpop.permute.xlu0 %1205
    %v1208 = vmul.f32 %v1190, %v1206
    %v1209 = vsel %vm153, %v1105, 0
    %1211 = vmatprep.subr.mxu0 0.0
    %1212 = vmatpush1.msra.mxu0 %v44
    %1213 = vmatprep.subr.mxu0 0.0
    %1214 = vmatpush1.msra.mxu0 %v45
    %1215 = vmatprep.subr.mxu0 0.0
    %1216 = vmatpush1.msra.mxu0 %v46
    %1217 = vmatprep.subr.mxu0 0.0
    %1218 = vmatpush1.msra.mxu0 %v47
    %1219 = vmatprep.subr.mxu0 0.0
    %1220 = vmatpush1.msra.mxu0 0.0
    %1221 = vmatprep.subr.mxu0 0.0
    %1222 = vmatpush1.msra.mxu0 0.0
    %1223 = vmatprep.subr.mxu0 0.0
    %1224 = vmatpush1.msra.mxu0 0.0
    %1225 = vmatprep.subr.mxu0 0.0
    %1226 = vmatpush1.msra.mxu0 0.0
    %1227 = vmatprep.subr.mxu0 0.0
    %1228 = vmatpush1.msra.mxu0 0.0
    %1229 = vmatprep.subr.mxu0 0.0
    %1230 = vmatpush1.msra.mxu0 0.0
    %1231 = vmatprep.subr.mxu0 0.0
    %1232 = vmatpush1.msra.mxu0 0.0
    %1233 = vmatprep.subr.mxu0 0.0
    %1234 = vmatpush1.msra.mxu0 0.0
    %1235 = vmatprep.subr.mxu0 0.0
    %1236 = vmatpush1.msra.mxu0 0.0
    %1237 = vmatprep.subr.mxu0 0.0
    %1238 = vmatpush1.msra.mxu0 0.0
    %1239 = vmatprep.subr.mxu0 0.0
    %1240 = vmatpush1.msra.mxu0 0.0
    %1241 = vmatprep.subr.mxu0 0.0
    %1242 = vmatpush1.msra.mxu0 0.0
    %1243 = vmatprep.subr.mxu0 0.0
    %1244 = vmatpush1.msra.mxu0 0.0
    %1245 = vmatprep.subr.mxu0 0.0
    %1246 = vmatpush1.msra.mxu0 0.0
    %1247 = vmatprep.subr.mxu0 0.0
    %1248 = vmatpush1.msra.mxu0 0.0
    %1249 = vmatprep.subr.mxu0 0.0
    %1250 = vmatpush1.msra.mxu0 0.0
    %1251 = vmatprep.subr.mxu0 0.0
    %1252 = vmatpush1.msra.mxu0 0.0
    %1253 = vmatprep.subr.mxu0 0.0
    %1254 = vmatpush1.msra.mxu0 0.0
    %1255 = vmatprep.subr.mxu0 0.0
    %1256 = vmatpush1.msra.mxu0 0.0
    %1257 = vmatprep.subr.mxu0 0.0
    %1258 = vmatpush1.msra.mxu0 0.0
    %1259 = vmatprep.subr.mxu0 0.0
    %1260 = vmatpush1.msra.mxu0 0.0
    %1261 = vmatprep.subr.mxu0 0.0
    %1262 = vmatpush1.msra.mxu0 0.0
    %1263 = vmatprep.subr.mxu0 0.0
    %1264 = vmatpush1.msra.mxu0 0.0
    %1265 = vmatprep.subr.mxu0 0.0
    %1266 = vmatpush1.msra.mxu0 0.0
    %1267 = vmatprep.subr.mxu0 0.0
    %1268 = vmatpush1.msra.mxu0 0.0
    %1269 = vmatprep.subr.mxu0 0.0
    %1270 = vmatpush1.msra.mxu0 0.0
    %1271 = vmatprep.subr.mxu0 0.0
    %1272 = vmatpush1.msra.mxu0 0.0
    %1273 = vmatprep.subr.mxu0 0.0
    %1274 = vmatpush1.msra.mxu0 0.0
    %1275 = vmatprep.mubr.f32.mxu0 0.0
    %1276 = vmatmul.mubr.f32.gmra.mrb[0].mxu0 %v1209
    %v1277 = vpop.f32.mrb[0].mxu0
    %v1278 = vadd.f32 0.0, %v1277
    %v1279 = vpop.f32.mrb[0].mxu0
    %1280 = vdwg.mxu0
    %v1282 = vrot.slane %v1278, 6
    %v1284 = vadd.f32 %v150, %v1282
    %v1285 = vxor.u32 %v1284, 2147483648
    %v1286 = vmul.f32 %v1285, 1.442695
    %v1287 = vpow.pop %v1286
    %v1288 = vadd.f32 %v1287, 1.0
    %v1289 = vrcp.pop %v1288
    %v1290 = vmul.f32 1.0, %v1289
    %v1291 = vtanh.pop %v1284
    %v1293 = vrot.slane %v1096, 6
    %v1295 = vmul.f32 %v1290, %v1293
    %1297 = vrot.lane.b32.xlu0 %v1291, 64
    %v1298 = vpop.permute.xlu0 %1297
    %v1300 = vmul.f32 %v1290, %v1298
    %1302 = vrot.lane.b32.xlu0 %v1300, 32
    %v1303 = vpop.permute.xlu0 %1302
    %v1305 = vadd.f32 %v1295, %v1303
    %v1306 = vtanh.pop %v1305
    %1308 = vrot.lane.b32.xlu0 %v1306, 64
    %v1309 = vpop.permute.xlu0 %1308
    %v1311 = vmul.f32 %v1290, %v1309
    %1313 = vrot.lane.b32.xlu0 %v1311, 32
    %v1314 = vpop.permute.xlu0 %1313
    %v1317 = vrot.slane %v1208, 6
    %1318 = vrot.lane.b32.xlu0 %v1317, 64
    %v1319 = vpop.permute.xlu0 %1318
    %v1321 = vsel %vm153, %v1314, %v1319
    %v1323 = vrot.slane %v1321, 2
    %v1324 = vsel %vm263, %v1323, 0
    %1326 = vmatprep.subr.mxu0 0.0
    %1327 = vmatpush1.msra.mxu0 %v48
    %1328 = vmatprep.subr.mxu0 0.0
    %1329 = vmatpush1.msra.mxu0 %v49
    %1330 = vmatprep.subr.mxu0 0.0
    %1331 = vmatpush1.msra.mxu0 %v50
    %1332 = vmatprep.subr.mxu0 0.0
    %1333 = vmatpush1.msra.mxu0 %v51
    %1334 = vmatprep.subr.mxu0 0.0
    %1335 = vmatpush1.msra.mxu0 %v52
    %1336 = vmatprep.subr.mxu0 0.0
    %1337 = vmatpush1.msra.mxu0 %v53
    %1338 = vmatprep.subr.mxu0 0.0
    %1339 = vmatpush1.msra.mxu0 %v54
    %1340 = vmatprep.subr.mxu0 0.0
    %1341 = vmatpush1.msra.mxu0 %v55
    %1342 = vmatprep.subr.mxu0 0.0
    %1343 = vmatpush1.msra.mxu0 0.0
    %1344 = vmatprep.subr.mxu0 0.0
    %1345 = vmatpush1.msra.mxu0 0.0
    %1346 = vmatprep.subr.mxu0 0.0
    %1347 = vmatpush1.msra.mxu0 0.0
    %1348 = vmatprep.subr.mxu0 0.0
    %1349 = vmatpush1.msra.mxu0 0.0
    %1350 = vmatprep.subr.mxu0 0.0
    %1351 = vmatpush1.msra.mxu0 0.0
    %1352 = vmatprep.subr.mxu0 0.0
    %1353 = vmatpush1.msra.mxu0 0.0
    %1354 = vmatprep.subr.mxu0 0.0
    %1355 = vmatpush1.msra.mxu0 0.0
    %1356 = vmatprep.subr.mxu0 0.0
    %1357 = vmatpush1.msra.mxu0 0.0
    %1358 = vmatprep.subr.mxu0 0.0
    %1359 = vmatpush1.msra.mxu0 0.0
    %1360 = vmatprep.subr.mxu0 0.0
    %1361 = vmatpush1.msra.mxu0 0.0
    %1362 = vmatprep.subr.mxu0 0.0
    %1363 = vmatpush1.msra.mxu0 0.0
    %1364 = vmatprep.subr.mxu0 0.0
    %1365 = vmatpush1.msra.mxu0 0.0
    %1366 = vmatprep.subr.mxu0 0.0
    %1367 = vmatpush1.msra.mxu0 0.0
    %1368 = vmatprep.subr.mxu0 0.0
    %1369 = vmatpush1.msra.mxu0 0.0
    %1370 = vmatprep.subr.mxu0 0.0
    %1371 = vmatpush1.msra.mxu0 0.0
    %1372 = vmatprep.subr.mxu0 0.0
    %1373 = vmatpush1.msra.mxu0 0.0
    %1374 = vmatprep.subr.mxu0 0.0
    %1375 = vmatpush1.msra.mxu0 0.0
    %1376 = vmatprep.subr.mxu0 0.0
    %1377 = vmatpush1.msra.mxu0 0.0
    %1378 = vmatprep.subr.mxu0 0.0
    %1379 = vmatpush1.msra.mxu0 0.0
    %1380 = vmatprep.subr.mxu0 0.0
    %1381 = vmatpush1.msra.mxu0 0.0
    %1382 = vmatprep.subr.mxu0 0.0
    %1383 = vmatpush1.msra.mxu0 0.0
    %1384 = vmatprep.subr.mxu0 0.0
    %1385 = vmatpush1.msra.mxu0 0.0
    %1386 = vmatprep.subr.mxu0 0.0
    %1387 = vmatpush1.msra.mxu0 0.0
    %1388 = vmatprep.subr.mxu0 0.0
    %1389 = vmatpush1.msra.mxu0 0.0
    %1390 = vmatprep.mubr.f32.mxu0 0.0
    %1391 = vmatmul.mubr.f32.gmra.mrb[0].mxu0 %v1324
    %v1392 = vpop.f32.mrb[0].mxu0
    %v1393 = vadd.f32 %v261, %v1392
    %v1394 = vpop.f32.mrb[0].mxu0
    %1395 = vdwg.mxu0
    %v1396 = vxor.u32 %v1393, 2147483648
    %v1397 = vmul.f32 %v1396, 1.442695
    %v1398 = vpow.pop %v1397
    %v1399 = vadd.f32 %v1398, 1.0
    %v1400 = vrcp.pop %v1399
    %v1401 = vmul.f32 1.0, %v1400
    %v1402 = vtanh.pop %v1393
    %v1403 = vmul.f32 %v1401, %v1202
    %1405 = vrot.lane.b32.xlu0 %v1402, 64
    %v1406 = vpop.permute.xlu0 %1405
    %v1408 = vmul.f32 %v1401, %v1406
    %1410 = vrot.lane.b32.xlu0 %v1408, 32
    %v1411 = vpop.permute.xlu0 %1410
    %v1413 = vadd.f32 %v1403, %v1411
    %v1414 = vtanh.pop %v1413
    %1416 = vrot.lane.b32.xlu0 %v1414, 64
    %v1417 = vpop.permute.xlu0 %1416
    %v1419 = vmul.f32 %v1401, %v1417
    %v1420 = vrot.slane %v1311, 2
    %1421 = vrot.lane.b32.xlu0 %v1420, 32
    %v1422 = vpop.permute.xlu0 %1421
    %v1423 = vsel %vm153, %v1422, 0
    %1425 = vmatprep.subr.mxu0 0.0
    %1426 = vmatpush1.msra.mxu0 %v44
    %1427 = vmatprep.subr.mxu0 0.0
    %1428 = vmatpush1.msra.mxu0 %v45
    %1429 = vmatprep.subr.mxu0 0.0
    %1430 = vmatpush1.msra.mxu0 %v46
    %1431 = vmatprep.subr.mxu0 0.0
    %1432 = vmatpush1.msra.mxu0 %v47
    %1433 = vmatprep.subr.mxu0 0.0
    %1434 = vmatpush1.msra.mxu0 0.0
    %1435 = vmatprep.subr.mxu0 0.0
    %1436 = vmatpush1.msra.mxu0 0.0
    %1437 = vmatprep.subr.mxu0 0.0
    %1438 = vmatpush1.msra.mxu0 0.0
    %1439 = vmatprep.subr.mxu0 0.0
    %1440 = vmatpush1.msra.mxu0 0.0
    %1441 = vmatprep.subr.mxu0 0.0
    %1442 = vmatpush1.msra.mxu0 0.0
    %1443 = vmatprep.subr.mxu0 0.0
    %1444 = vmatpush1.msra.mxu0 0.0
    %1445 = vmatprep.subr.mxu0 0.0
    %1446 = vmatpush1.msra.mxu0 0.0
    %1447 = vmatprep.subr.mxu0 0.0
    %1448 = vmatpush1.msra.mxu0 0.0
    %1449 = vmatprep.subr.mxu0 0.0
    %1450 = vmatpush1.msra.mxu0 0.0
    %1451 = vmatprep.subr.mxu0 0.0
    %1452 = vmatpush1.msra.mxu0 0.0
    %1453 = vmatprep.subr.mxu0 0.0
    %1454 = vmatpush1.msra.mxu0 0.0
    %1455 = vmatprep.subr.mxu0 0.0
    %1456 = vmatpush1.msra.mxu0 0.0
    %1457 = vmatprep.subr.mxu0 0.0
    %1458 = vmatpush1.msra.mxu0 0.0
    %1459 = vmatprep.subr.mxu0 0.0
    %1460 = vmatpush1.msra.mxu0 0.0
    %1461 = vmatprep.subr.mxu0 0.0
    %1462 = vmatpush1.msra.mxu0 0.0
    %1463 = vmatprep.subr.mxu0 0.0
    %1464 = vmatpush1.msra.mxu0 0.0
    %1465 = vmatprep.subr.mxu0 0.0
    %1466 = vmatpush1.msra.mxu0 0.0
    %1467 = vmatprep.subr.mxu0 0.0
    %1468 = vmatpush1.msra.mxu0 0.0
    %1469 = vmatprep.subr.mxu0 0.0
    %1470 = vmatpush1.msra.mxu0 0.0
    %1471 = vmatprep.subr.mxu0 0.0
    %1472 = vmatpush1.msra.mxu0 0.0
    %1473 = vmatprep.subr.mxu0 0.0
    %1474 = vmatpush1.msra.mxu0 0.0
    %1475 = vmatprep.subr.mxu0 0.0
    %1476 = vmatpush1.msra.mxu0 0.0
    %1477 = vmatprep.subr.mxu0 0.0
    %1478 = vmatpush1.msra.mxu0 0.0
    %1479 = vmatprep.subr.mxu0 0.0
    %1480 = vmatpush1.msra.mxu0 0.0
    %1481 = vmatprep.subr.mxu0 0.0
    %1482 = vmatpush1.msra.mxu0 0.0
    %1483 = vmatprep.subr.mxu0 0.0
    %1484 = vmatpush1.msra.mxu0 0.0
    %1485 = vmatprep.subr.mxu0 0.0
    %1486 = vmatpush1.msra.mxu0 0.0
    %1487 = vmatprep.subr.mxu0 0.0
    %1488 = vmatpush1.msra.mxu0 0.0
    %1489 = vmatprep.mubr.f32.mxu0 0.0
    %1490 = vmatmul.mubr.f32.gmra.mrb[0].mxu0 %v1423
    %v1491 = vpop.f32.mrb[0].mxu0
    %v1492 = vadd.f32 0.0, %v1491
    %v1493 = vpop.f32.mrb[0].mxu0
    %1494 = vdwg.mxu0
    %v1496 = vrot.slane %v1492, 4
    %v1498 = vadd.f32 %v150, %v1496
    %v1499 = vxor.u32 %v1498, 2147483648
    %v1500 = vmul.f32 %v1499, 1.442695
    %v1501 = vpow.pop %v1500
    %v1502 = vadd.f32 %v1501, 1.0
    %v1503 = vrcp.pop %v1502
    %v1504 = vmul.f32 1.0, %v1503
    %v1505 = vtanh.pop %v1498
    %v1507 = vrot.slane %v1305, 6
    %v1509 = vmul.f32 %v1504, %v1507
    %1511 = vrot.lane.b32.xlu0 %v1505, 64
    %v1512 = vpop.permute.xlu0 %1511
    %v1514 = vmul.f32 %v1504, %v1512
    %1516 = vrot.lane.b32.xlu0 %v1514, 32
    %v1517 = vpop.permute.xlu0 %1516
    %v1519 = vadd.f32 %v1509, %v1517
    %v1520 = vtanh.pop %v1519
    %1522 = vrot.lane.b32.xlu0 %v1520, 64
    %v1523 = vpop.permute.xlu0 %1522
    %v1525 = vmul.f32 %v1504, %v1523
    %1527 = vrot.lane.b32.xlu0 %v1525, 32
    %v1528 = vpop.permute.xlu0 %1527
    %v1531 = vrot.slane %v1419, 4
    %1532 = vrot.lane.b32.xlu0 %v1531, 64
    %v1533 = vpop.permute.xlu0 %1532
    %v1535 = vsel %vm153, %v1528, %v1533
    %v1537 = vrot.slane %v1535, 4
    %v1538 = vsel %vm263, %v1537, 0
    %1540 = vmatprep.subr.mxu0 0.0
    %1541 = vmatpush1.msra.mxu0 %v48
    %1542 = vmatprep.subr.mxu0 0.0
    %1543 = vmatpush1.msra.mxu0 %v49
    %1544 = vmatprep.subr.mxu0 0.0
    %1545 = vmatpush1.msra.mxu0 %v50
    %1546 = vmatprep.subr.mxu0 0.0
    %1547 = vmatpush1.msra.mxu0 %v51
    %1548 = vmatprep.subr.mxu0 0.0
    %1549 = vmatpush1.msra.mxu0 %v52
    %1550 = vmatprep.subr.mxu0 0.0
    %1551 = vmatpush1.msra.mxu0 %v53
    %1552 = vmatprep.subr.mxu0 0.0
    %1553 = vmatpush1.msra.mxu0 %v54
    %1554 = vmatprep.subr.mxu0 0.0
    %1555 = vmatpush1.msra.mxu0 %v55
    %1556 = vmatprep.subr.mxu0 0.0
    %1557 = vmatpush1.msra.mxu0 0.0
    %1558 = vmatprep.subr.mxu0 0.0
    %1559 = vmatpush1.msra.mxu0 0.0
    %1560 = vmatprep.subr.mxu0 0.0
    %1561 = vmatpush1.msra.mxu0 0.0
    %1562 = vmatprep.subr.mxu0 0.0
    %1563 = vmatpush1.msra.mxu0 0.0
    %1564 = vmatprep.subr.mxu0 0.0
    %1565 = vmatpush1.msra.mxu0 0.0
    %1566 = vmatprep.subr.mxu0 0.0
    %1567 = vmatpush1.msra.mxu0 0.0
    %1568 = vmatprep.subr.mxu0 0.0
    %1569 = vmatpush1.msra.mxu0 0.0
    %1570 = vmatprep.subr.mxu0 0.0
    %1571 = vmatpush1.msra.mxu0 0.0
    %1572 = vmatprep.subr.mxu0 0.0
    %1573 = vmatpush1.msra.mxu0 0.0
    %1574 = vmatprep.subr.mxu0 0.0
    %1575 = vmatpush1.msra.mxu0 0.0
    %1576 = vmatprep.subr.mxu0 0.0
    %1577 = vmatpush1.msra.mxu0 0.0
    %1578 = vmatprep.subr.mxu0 0.0
    %1579 = vmatpush1.msra.mxu0 0.0
    %1580 = vmatprep.subr.mxu0 0.0
    %1581 = vmatpush1.msra.mxu0 0.0
    %1582 = vmatprep.subr.mxu0 0.0
    %1583 = vmatpush1.msra.mxu0 0.0
    %1584 = vmatprep.subr.mxu0 0.0
    %1585 = vmatpush1.msra.mxu0 0.0
    %1586 = vmatprep.subr.mxu0 0.0
    %1587 = vmatpush1.msra.mxu0 0.0
    %1588 = vmatprep.subr.mxu0 0.0
    %1589 = vmatpush1.msra.mxu0 0.0
    %1590 = vmatprep.subr.mxu0 0.0
    %1591 = vmatpush1.msra.mxu0 0.0
    %1592 = vmatprep.subr.mxu0 0.0
    %1593 = vmatpush1.msra.mxu0 0.0
    %1594 = vmatprep.subr.mxu0 0.0
    %1595 = vmatpush1.msra.mxu0 0.0
    %1596 = vmatprep.subr.mxu0 0.0
    %1597 = vmatpush1.msra.mxu0 0.0
    %1598 = vmatprep.subr.mxu0 0.0
    %1599 = vmatpush1.msra.mxu0 0.0
    %1600 = vmatprep.subr.mxu0 0.0
    %1601 = vmatpush1.msra.mxu0 0.0
    %1602 = vmatprep.subr.mxu0 0.0
    %1603 = vmatpush1.msra.mxu0 0.0
    %1604 = vmatprep.mubr.f32.mxu0 0.0
    %1605 = vmatmul.mubr.f32.gmra.mrb[0].mxu0 %v1538
    %v1606 = vpop.f32.mrb[0].mxu0
    %v1607 = vadd.f32 %v261, %v1606
    %v1608 = vpop.f32.mrb[0].mxu0
    %1609 = vdwg.mxu0
    %v1610 = vxor.u32 %v1607, 2147483648
    %v1611 = vmul.f32 %v1610, 1.442695
    %v1612 = vpow.pop %v1611
    %v1613 = vadd.f32 %v1612, 1.0
    %v1614 = vrcp.pop %v1613
    %v1615 = vmul.f32 1.0, %v1614
    %v1616 = vtanh.pop %v1607
    %v1617 = vmul.f32 %v1615, %v1413
    %1619 = vrot.lane.b32.xlu0 %v1616, 64
    %v1620 = vpop.permute.xlu0 %1619
    %v1622 = vmul.f32 %v1615, %v1620
    %1624 = vrot.lane.b32.xlu0 %v1622, 32
    %v1625 = vpop.permute.xlu0 %1624
    %v1627 = vadd.f32 %v1617, %v1625
    %v1628 = vtanh.pop %v1627
    %1630 = vrot.lane.b32.xlu0 %v1628, 64
    %v1631 = vpop.permute.xlu0 %1630
    %v1633 = vmul.f32 %v1615, %v1631
    %v1634 = vrot.slane %v1525, 4
    %1635 = vrot.lane.b32.xlu0 %v1634, 32
    %v1636 = vpop.permute.xlu0 %1635
    %v1637 = vsel %vm153, %v1636, 0
    %1639 = vmatprep.subr.mxu0 0.0
    %1640 = vmatpush1.msra.mxu0 %v44
    %1641 = vmatprep.subr.mxu0 0.0
    %1642 = vmatpush1.msra.mxu0 %v45
    %1643 = vmatprep.subr.mxu0 0.0
    %1644 = vmatpush1.msra.mxu0 %v46
    %1645 = vmatprep.subr.mxu0 0.0
    %1646 = vmatpush1.msra.mxu0 %v47
    %1647 = vmatprep.subr.mxu0 0.0
    %1648 = vmatpush1.msra.mxu0 0.0
    %1649 = vmatprep.subr.mxu0 0.0
    %1650 = vmatpush1.msra.mxu0 0.0
    %1651 = vmatprep.subr.mxu0 0.0
    %1652 = vmatpush1.msra.mxu0 0.0
    %1653 = vmatprep.subr.mxu0 0.0
    %1654 = vmatpush1.msra.mxu0 0.0
    %1655 = vmatprep.subr.mxu0 0.0
    %1656 = vmatpush1.msra.mxu0 0.0
    %1657 = vmatprep.subr.mxu0 0.0
    %1658 = vmatpush1.msra.mxu0 0.0
    %1659 = vmatprep.subr.mxu0 0.0
    %1660 = vmatpush1.msra.mxu0 0.0
    %1661 = vmatprep.subr.mxu0 0.0
    %1662 = vmatpush1.msra.mxu0 0.0
    %1663 = vmatprep.subr.mxu0 0.0
    %1664 = vmatpush1.msra.mxu0 0.0
    %1665 = vmatprep.subr.mxu0 0.0
    %1666 = vmatpush1.msra.mxu0 0.0
    %1667 = vmatprep.subr.mxu0 0.0
    %1668 = vmatpush1.msra.mxu0 0.0
    %1669 = vmatprep.subr.mxu0 0.0
    %1670 = vmatpush1.msra.mxu0 0.0
    %1671 = vmatprep.subr.mxu0 0.0
    %1672 = vmatpush1.msra.mxu0 0.0
    %1673 = vmatprep.subr.mxu0 0.0
    %1674 = vmatpush1.msra.mxu0 0.0
    %1675 = vmatprep.subr.mxu0 0.0
    %1676 = vmatpush1.msra.mxu0 0.0
    %1677 = vmatprep.subr.mxu0 0.0
    %1678 = vmatpush1.msra.mxu0 0.0
    %1679 = vmatprep.subr.mxu0 0.0
    %1680 = vmatpush1.msra.mxu0 0.0
    %1681 = vmatprep.subr.mxu0 0.0
    %1682 = vmatpush1.msra.mxu0 0.0
    %1683 = vmatprep.subr.mxu0 0.0
    %1684 = vmatpush1.msra.mxu0 0.0
    %1685 = vmatprep.subr.mxu0 0.0
    %1686 = vmatpush1.msra.mxu0 0.0
    %1687 = vmatprep.subr.mxu0 0.0
    %1688 = vmatpush1.msra.mxu0 0.0
    %1689 = vmatprep.subr.mxu0 0.0
    %1690 = vmatpush1.msra.mxu0 0.0
    %1691 = vmatprep.subr.mxu0 0.0
    %1692 = vmatpush1.msra.mxu0 0.0
    %1693 = vmatprep.subr.mxu0 0.0
    %1694 = vmatpush1.msra.mxu0 0.0
    %1695 = vmatprep.subr.mxu0 0.0
    %1696 = vmatpush1.msra.mxu0 0.0
    %1697 = vmatprep.subr.mxu0 0.0
    %1698 = vmatpush1.msra.mxu0 0.0
    %1699 = vmatprep.subr.mxu0 0.0
    %1700 = vmatpush1.msra.mxu0 0.0
    %1701 = vmatprep.subr.mxu0 0.0
    %1702 = vmatpush1.msra.mxu0 0.0
    %1703 = vmatprep.mubr.f32.mxu0 0.0
    %1704 = vmatmul.mubr.f32.gmra.mrb[0].mxu0 %v1637
    %v1705 = vpop.f32.mrb[0].mxu0
    %v1706 = vadd.f32 0.0, %v1705
    %v1707 = vpop.f32.mrb[0].mxu0
    %1708 = vdwg.mxu0
    %v1710 = vrot.slane %v1706, 2
    %v1712 = vadd.f32 %v150, %v1710
    %v1713 = vxor.u32 %v1712, 2147483648
    %v1714 = vmul.f32 %v1713, 1.442695
    %v1715 = vpow.pop %v1714
    %v1716 = vadd.f32 %v1715, 1.0
    %v1717 = vrcp.pop %v1716
    %v1718 = vmul.f32 1.0, %v1717
    %v1719 = vtanh.pop %v1712
    %v1721 = vrot.slane %v1519, 6
    %v1723 = vmul.f32 %v1718, %v1721
    %1725 = vrot.lane.b32.xlu0 %v1719, 64
    %v1726 = vpop.permute.xlu0 %1725
    %v1728 = vmul.f32 %v1718, %v1726
    %1730 = vrot.lane.b32.xlu0 %v1728, 32
    %v1731 = vpop.permute.xlu0 %1730
    %v1733 = vadd.f32 %v1723, %v1731
    %v1734 = vtanh.pop %v1733
    %1736 = vrot.lane.b32.xlu0 %v1734, 64
    %v1737 = vpop.permute.xlu0 %1736
    %v1739 = vmul.f32 %v1718, %v1737
    %1741 = vrot.lane.b32.xlu0 %v1739, 32
    %v1742 = vpop.permute.xlu0 %1741
    %v1745 = vrot.slane %v1633, 2
    %1746 = vrot.lane.b32.xlu0 %v1745, 64
    %v1747 = vpop.permute.xlu0 %1746
    %v1749 = vsel %vm153, %v1742, %v1747
    %v1751 = vrot.slane %v1749, 6
    %v1752 = vsel %vm263, %v1751, 0
    %1754 = vmatprep.subr.mxu0 0.0
    %1755 = vmatpush1.msra.mxu0 %v48
    %1756 = vmatprep.subr.mxu0 0.0
    %1757 = vmatpush1.msra.mxu0 %v49
    %1758 = vmatprep.subr.mxu0 0.0
    %1759 = vmatpush1.msra.mxu0 %v50
    %1760 = vmatprep.subr.mxu0 0.0
    %1761 = vmatpush1.msra.mxu0 %v51
    %1762 = vmatprep.subr.mxu0 0.0
    %1763 = vmatpush1.msra.mxu0 %v52
    %1764 = vmatprep.subr.mxu0 0.0
    %1765 = vmatpush1.msra.mxu0 %v53
    %1766 = vmatprep.subr.mxu0 0.0
    %1767 = vmatpush1.msra.mxu0 %v54
    %1768 = vmatprep.subr.mxu0 0.0
    %1769 = vmatpush1.msra.mxu0 %v55
    %1770 = vmatprep.subr.mxu0 0.0
    %1771 = vmatpush1.msra.mxu0 0.0
    %1772 = vmatprep.subr.mxu0 0.0
    %1773 = vmatpush1.msra.mxu0 0.0
    %1774 = vmatprep.subr.mxu0 0.0
    %1775 = vmatpush1.msra.mxu0 0.0
    %1776 = vmatprep.subr.mxu0 0.0
    %1777 = vmatpush1.msra.mxu0 0.0
    %1778 = vmatprep.subr.mxu0 0.0
    %1779 = vmatpush1.msra.mxu0 0.0
    %1780 = vmatprep.subr.mxu0 0.0
    %1781 = vmatpush1.msra.mxu0 0.0
    %1782 = vmatprep.subr.mxu0 0.0
    %1783 = vmatpush1.msra.mxu0 0.0
    %1784 = vmatprep.subr.mxu0 0.0
    %1785 = vmatpush1.msra.mxu0 0.0
    %1786 = vmatprep.subr.mxu0 0.0
    %1787 = vmatpush1.msra.mxu0 0.0
    %1788 = vmatprep.subr.mxu0 0.0
    %1789 = vmatpush1.msra.mxu0 0.0
    %1790 = vmatprep.subr.mxu0 0.0
    %1791 = vmatpush1.msra.mxu0 0.0
    %1792 = vmatprep.subr.mxu0 0.0
    %1793 = vmatpush1.msra.mxu0 0.0
    %1794 = vmatprep.subr.mxu0 0.0
    %1795 = vmatpush1.msra.mxu0 0.0
    %1796 = vmatprep.subr.mxu0 0.0
    %1797 = vmatpush1.msra.mxu0 0.0
    %1798 = vmatprep.subr.mxu0 0.0
    %1799 = vmatpush1.msra.mxu0 0.0
    %1800 = vmatprep.subr.mxu0 0.0
    %1801 = vmatpush1.msra.mxu0 0.0
    %1802 = vmatprep.subr.mxu0 0.0
    %1803 = vmatpush1.msra.mxu0 0.0
    %1804 = vmatprep.subr.mxu0 0.0
    %1805 = vmatpush1.msra.mxu0 0.0
    %1806 = vmatprep.subr.mxu0 0.0
    %1807 = vmatpush1.msra.mxu0 0.0
    %1808 = vmatprep.subr.mxu0 0.0
    %1809 = vmatpush1.msra.mxu0 0.0
    %1810 = vmatprep.subr.mxu0 0.0
    %1811 = vmatpush1.msra.mxu0 0.0
    %1812 = vmatprep.subr.mxu0 0.0
    %1813 = vmatpush1.msra.mxu0 0.0
    %1814 = vmatprep.subr.mxu0 0.0
    %1815 = vmatpush1.msra.mxu0 0.0
    %1816 = vmatprep.subr.mxu0 0.0
    %1817 = vmatpush1.msra.mxu0 0.0
    %1818 = vmatprep.mubr.f32.mxu0 0.0
    %1819 = vmatmul.mubr.f32.gmra.mrb[0].mxu0 %v1752
    %v1820 = vpop.f32.mrb[0].mxu0
    %v1821 = vadd.f32 %v261, %v1820
    %v1822 = vpop.f32.mrb[0].mxu0
    %1823 = vdwg.mxu0
    %v1824 = vxor.u32 %v1821, 2147483648
    %v1825 = vmul.f32 %v1824, 1.442695
    %v1826 = vpow.pop %v1825
    %v1827 = vadd.f32 %v1826, 1.0
    %v1828 = vrcp.pop %v1827
    %v1829 = vmul.f32 1.0, %v1828
    %v1830 = vtanh.pop %v1821
    %v1831 = vmul.f32 %v1829, %v1627
    %1833 = vrot.lane.b32.xlu0 %v1830, 64
    %v1834 = vpop.permute.xlu0 %1833
    %v1836 = vmul.f32 %v1829, %v1834
    %1838 = vrot.lane.b32.xlu0 %v1836, 32
    %v1839 = vpop.permute.xlu0 %1838
    %v1841 = vadd.f32 %v1831, %v1839
    %v1842 = vtanh.pop %v1841
    %1844 = vrot.lane.b32.xlu0 %v1842, 64
    %v1845 = vpop.permute.xlu0 %1844
    %v1847 = vmul.f32 %v1829, %v1845
    %v1848 = vld [vmem:[%s6] sm:$0xff]
    %v1849 = vld [vmem:[%s6 + $0x8] sm:$0xff]
    %v1850 = vld [vmem:[%s6 + $0x10] sm:$0xff]
    %v1851 = vld [vmem:[%s6 + $0x18] sm:$0xff]
    %v1852 = vld [vmem:[%s7] sm:$0x1]
    %v1854 = vlaneseq
    %v1855 = vshrl.u32 %v1854, 7
    %v1856 = vsub.s32 0, %v1855
    %v1857 = vrot.slane %v1852, %v1856
    %1860 = vrot.lane.b32.xlu0 %v1847, 32
    %v1861 = vpop.permute.xlu0 %1860
    %v1862 = vsel %vm153, %v1861, 0
    %1864 = vmatprep.subr.mxu0 0.0
    %1865 = vmatpush1.msra.mxu0 %v1848
    %1866 = vmatprep.subr.mxu0 0.0
    %1867 = vmatpush1.msra.mxu0 %v1849
    %1868 = vmatprep.subr.mxu0 0.0
    %1869 = vmatpush1.msra.mxu0 %v1850
    %1870 = vmatprep.subr.mxu0 0.0
    %1871 = vmatpush1.msra.mxu0 %v1851
    %1872 = vmatprep.subr.mxu0 0.0
    %1873 = vmatpush1.msra.mxu0 0.0
    %1874 = vmatprep.subr.mxu0 0.0
    %1875 = vmatpush1.msra.mxu0 0.0
    %1876 = vmatprep.subr.mxu0 0.0
    %1877 = vmatpush1.msra.mxu0 0.0
    %1878 = vmatprep.subr.mxu0 0.0
    %1879 = vmatpush1.msra.mxu0 0.0
    %1880 = vmatprep.subr.mxu0 0.0
    %1881 = vmatpush1.msra.mxu0 0.0
    %1882 = vmatprep.subr.mxu0 0.0
    %1883 = vmatpush1.msra.mxu0 0.0
    %1884 = vmatprep.subr.mxu0 0.0
    %1885 = vmatpush1.msra.mxu0 0.0
    %1886 = vmatprep.subr.mxu0 0.0
    %1887 = vmatpush1.msra.mxu0 0.0
    %1888 = vmatprep.subr.mxu0 0.0
    %1889 = vmatpush1.msra.mxu0 0.0
    %1890 = vmatprep.subr.mxu0 0.0
    %1891 = vmatpush1.msra.mxu0 0.0
    %1892 = vmatprep.subr.mxu0 0.0
    %1893 = vmatpush1.msra.mxu0 0.0
    %1894 = vmatprep.subr.mxu0 0.0
    %1895 = vmatpush1.msra.mxu0 0.0
    %1896 = vmatprep.subr.mxu0 0.0
    %1897 = vmatpush1.msra.mxu0 0.0
    %1898 = vmatprep.subr.mxu0 0.0
    %1899 = vmatpush1.msra.mxu0 0.0
    %1900 = vmatprep.subr.mxu0 0.0
    %1901 = vmatpush1.msra.mxu0 0.0
    %1902 = vmatprep.subr.mxu0 0.0
    %1903 = vmatpush1.msra.mxu0 0.0
    %1904 = vmatprep.subr.mxu0 0.0
    %1905 = vmatpush1.msra.mxu0 0.0
    %1906 = vmatprep.subr.mxu0 0.0
    %1907 = vmatpush1.msra.mxu0 0.0
    %1908 = vmatprep.subr.mxu0 0.0
    %1909 = vmatpush1.msra.mxu0 0.0
    %1910 = vmatprep.subr.mxu0 0.0
    %1911 = vmatpush1.msra.mxu0 0.0
    %1912 = vmatprep.subr.mxu0 0.0
    %1913 = vmatpush1.msra.mxu0 0.0
    %1914 = vmatprep.subr.mxu0 0.0
    %1915 = vmatpush1.msra.mxu0 0.0
    %1916 = vmatprep.subr.mxu0 0.0
    %1917 = vmatpush1.msra.mxu0 0.0
    %1918 = vmatprep.subr.mxu0 0.0
    %1919 = vmatpush1.msra.mxu0 0.0
    %1920 = vmatprep.subr.mxu0 0.0
    %1921 = vmatpush1.msra.mxu0 0.0
    %1922 = vmatprep.subr.mxu0 0.0
    %1923 = vmatpush1.msra.mxu0 0.0
    %1924 = vmatprep.subr.mxu0 0.0
    %1925 = vmatpush1.msra.mxu0 0.0
    %1926 = vmatprep.subr.mxu0 0.0
    %1927 = vmatpush1.msra.mxu0 0.0
    %1928 = vmatprep.mubr.f32.mxu0 0.0
    %1929 = vmatmul.mubr.f32.gmra.mrb[0].mxu0 %v1862
    %v1930 = vpop.f32.mrb[0].mxu0
    %v1931 = vadd.f32 %v1857, %v1930
    %v1932 = vpop.f32.mrb[0].mxu0
    %1933 = vdwg.mxu0
    %vm1934 = vcmask 50176
    %1935 = vst.msk [vmem:[#allocation5] sm:$0x3] %vm1934, %v1931
    // Predicated region
    $region38: #{tpu_custom_call.1} parent=1 // pred_check
      _
    $region39: #{tpu_custom_call.1} parent=1 // pred_check_branch
      %1937 = sbr.rel (0) target = $region41
    $region40: #{tpu_custom_call.1} parent=1 // pred_region
      %s1939 = ssub.s32 32, 32
      %1940 = vsyncadd [#allocation4], %s1939
      %s1942 = sshll.u32 [#allocation5], 4
      %s1943 = int_to_ptr.vmem [resolvable:$true] %s1942
      %1945 = dma.vmem_to_hbm [thread:$0]  %s1943, 32, %s8, [#allocation4]
    $region41: #{tpu_custom_call.1} parent=1 // pred_fallthru
      _
    // Predicated region
    $region42: #{tpu_custom_call.1} parent=1 // pred_check
      _
    $region43: #{tpu_custom_call.1} parent=1 // pred_check_branch
      %1947 = sbr.rel (0) target = $region45
    $region44: #{tpu_custom_call.1} parent=1 // pred_region
      %1948 = dma.done [#allocation4], 32
    $region45: #{tpu_custom_call.1} parent=1 // pred_fallthru
      _
    %1949 = vsyncpa [#allocation3], 1
    %1950 = vsyncpa [#allocation4], 1

</llo_original>
